<compile_context>
chip_gen: v7x
topology: tpu7x:2x2x1
jax: 0.10.0
libtpu: 0.0.40
codegen_flags: <defaults>
</compile_context>

<pallas_src>
import math
import functools

import jax
import jax.numpy as jnp
from jax import lax
from jax.experimental import pallas as pl
from jax.experimental.pallas import tpu as pltpu

D_MODEL = 64
CONTEXT_LENGTH = 16
NUM_HEADS = 4


def _transformer_block_kernel(x_ref, w_ref, w2_ref, b_ref, mask_ref, o_ref, *,
                              num_heads, head_size, eps):
    # x_ref:   (T, C) f32      one batch element (grid iterates / shards over B)
    # w_ref:   (C, 8C) bf16    [Wqkv (3C) | Wproj (C) | W1 (4C)], LN gammas and
    #                          1/sqrt(hs) pre-folded on the host
    # w2_ref:  (4C, C) bf16
    # b_ref:   (1, 9C) f32     [b_qkv | b_proj | b1_fused | b2]
    # mask_ref:(T, T) f32      additive causal mask (0 / -1e30)
    T, C = x_ref.shape
    H, hs = num_heads, head_size
    HHS = H * hs  # == C

    x = x_ref[...]
    neg_mask = mask_ref[...]

    def norm(v):
        mu = jnp.mean(v, axis=-1, keepdims=True)
        d = v - mu
        var = jnp.mean(d * d, axis=-1, keepdims=True)
        return d * lax.rsqrt(var + eps)

    # ---- Attention (LN1 gamma/beta folded into Wqkv / b_qkv) ----
    n1 = norm(x).astype(jnp.bfloat16)
    qkv = jnp.dot(n1, w_ref[:, 0:3 * HHS],
                  preferred_element_type=jnp.float32) + b_ref[:, 0:3 * HHS]

    dn = (((1,), (1,)), ((), ()))  # contract head dim: q @ k^T, no transpose
    heads = []
    for h in range(H):
        q = qkv[:, h * hs:(h + 1) * hs].astype(jnp.bfloat16)
        k = qkv[:, HHS + h * hs:HHS + (h + 1) * hs].astype(jnp.bfloat16)
        v = qkv[:, 2 * HHS + h * hs:2 * HHS + (h + 1) * hs].astype(jnp.bfloat16)

        s = lax.dot_general(q, k, dn, preferred_element_type=jnp.float32)
        s = s + neg_mask                 # 1/sqrt(hs) already folded into Wq
        m = jnp.max(s, axis=-1, keepdims=True)
        e = jnp.exp(s - m)
        p = (e / jnp.sum(e, axis=-1, keepdims=True)).astype(jnp.bfloat16)
        heads.append(jnp.dot(p, v, preferred_element_type=jnp.float32))

    att = jnp.concatenate(heads, axis=-1).astype(jnp.bfloat16)      # (T, C)

    # Output projection + first residual (single matmul, no scratch round-trip).
    h1 = x + jnp.dot(att, w_ref[:, 3 * HHS:4 * HHS],
                     preferred_element_type=jnp.float32) + b_ref[:, 3 * HHS:4 * HHS]

    # ---- FeedForward (LN2 gamma/beta folded into W1 / b1) ----
    n2 = norm(h1).astype(jnp.bfloat16)
    ff = jnp.maximum(
        jnp.dot(n2, w_ref[:, 4 * HHS:8 * HHS],
                preferred_element_type=jnp.float32) + b_ref[:, 4 * HHS:8 * HHS],
        0.0)
    ff = jnp.dot(ff.astype(jnp.bfloat16), w2_ref[...],
                 preferred_element_type=jnp.float32) + b_ref[:, 8 * HHS:9 * HHS]

    o_ref[...] = (h1 + ff).astype(o_ref.dtype)


def transformer_block_forward(x, params, *, num_heads=NUM_HEADS, eps=1e-5):
    """x: (B, T, C) f32; params in PyTorch nn.Linear / nn.LayerNorm layout."""
    B, T, C = x.shape
    hs = C // num_heads
    scale = 1.0 / math.sqrt(hs)

    # ---- host-side layout plumbing (free): fuse QKV, fold scale + LN affine ----
    wq = jnp.concatenate([w.T for w in params["wq"]], axis=1) * scale   # (C, C)
    wk = jnp.concatenate([w.T for w in params["wk"]], axis=1)           # (C, C)
    wv = jnp.concatenate([w.T for w in params["wv"]], axis=1)           # (C, C)
    w_qkv = jnp.concatenate([wq, wk, wv], axis=1)                       # (C, 3C)

    g1, b1n = params["ln1_g"], params["ln1_b"]
    g2, b2n = params["ln2_g"], params["ln2_b"]
    w1t = params["w1"].T                                                # (C, 4C)
    w2t = params["w2"].T                                                # (4C, C)
    wpt = params["w_proj"].T                                            # (C, C)

    # Fold LayerNorm gamma/beta into downstream weights/biases:
    #   (norm(x)*g + b) @ W = norm(x) @ (g[:,None]*W) + (b @ W)
    b_qkv = (b1n @ w_qkv).reshape(1, -1)                                # (1, 3C)
    w_qkv_f = g1[:, None] * w_qkv
    b_ff1 = (b2n @ w1t + params["b1"]).reshape(1, -1)                   # (1, 4C)
    w1_f = g2[:, None] * w1t

    # Consolidated inputs: bf16 weight slabs + one f32 bias slab.
    w_slab = jnp.concatenate([w_qkv_f, wpt, w1_f], axis=1).astype(jnp.bfloat16)  # (C, 8C)
    w2_b = w2t.astype(jnp.bfloat16)                                              # (4C, C)
    bias_slab = jnp.concatenate(
        [b_qkv, params["b_proj"].reshape(1, -1), b_ff1,
         params["b2"].reshape(1, -1)], axis=1).astype(jnp.float32)               # (1, 9C)

    # Static causal additive mask, hoisted out of the kernel.
    neg_mask = jnp.where(jnp.tril(jnp.ones((T, T), dtype=bool)),
                         0.0, -1e30).astype(jnp.float32)

    kernel = functools.partial(_transformer_block_kernel,
                               num_heads=num_heads, head_size=hs, eps=eps)

    out = pl.pallas_call(
        kernel,
        out_shape=jax.ShapeDtypeStruct((B, T, C), x.dtype),
        grid_spec=pltpu.PrefetchScalarGridSpec(
            num_scalar_prefetch=0,
            grid=(B,),  # per-batch scores; shards across both TCs on v7x
            in_specs=[
                pl.BlockSpec((None, T, C), lambda b: (b, 0, 0)),
                pl.BlockSpec((C, 8 * C), lambda b: (0, 0)),
                pl.BlockSpec((4 * C, C), lambda b: (0, 0)),
                pl.BlockSpec((1, 9 * C), lambda b: (0, 0)),
                pl.BlockSpec((T, T), lambda b: (0, 0)),
            ],
            out_specs=pl.BlockSpec((None, T, C), lambda b: (b, 0, 0)),
        ),
        compiler_params=pltpu.CompilerParams(
            dimension_semantics=("parallel",)),
    )(x, w_slab, w2_b, bias_slab, neg_mask)
    return out


def _reference(x, params, num_heads=NUM_HEADS, eps=1e-5):
    C = x.shape[-1]
    hs = C // num_heads

    def ln(v, g, b):
        mu = v.mean(-1, keepdims=True)
        var = ((v - mu) ** 2).mean(-1, keepdims=True)
        return (v - mu) / jnp.sqrt(var + eps) * g + b

    h = ln(x, params["ln1_g"], params["ln1_b"])
    T = x.shape[1]
    mask = jnp.tril(jnp.ones((T, T), dtype=bool))
    heads = []
    for wq, wk, wv in zip(params["wq"], params["wk"], params["wv"]):
        q, k, v = h @ wq.T, h @ wk.T, h @ wv.T
        s = (q @ jnp.swapaxes(k, -2, -1)) / math.sqrt(hs)
        s = jnp.where(mask, s, -jnp.inf)
        w = jax.nn.softmax(s, axis=-1)
        heads.append(w @ v)
    att = jnp.concatenate(heads, axis=-1) @ params["w_proj"].T + params["b_proj"]
    x = x + att
    h2 = ln(x, params["ln2_g"], params["ln2_b"])
    ff = jnp.maximum(h2 @ params["w1"].T + params["b1"], 0.0) @ params["w2"].T + params["b2"]
    return x + ff


if __name__ == "__main__":
    key = jax.random.PRNGKey(0)
    B, T, C, H = 2, CONTEXT_LENGTH, D_MODEL, NUM_HEADS
    hs = C // H

    keys = iter(jax.random.split(key, 24))

    x = jax.random.normal(next(keys), (B, T, C), dtype=jnp.float32)

    def linear_w(k, out_f, in_f):
        bound = 1.0 / math.sqrt(in_f)
        return jax.random.uniform(k, (out_f, in_f), jnp.float32, -bound, bound)

    def linear_b(k, out_f, in_f):
        bound = 1.0 / math.sqrt(in_f)
        return jax.random.uniform(k, (out_f,), jnp.float32, -bound, bound)

    params = {
        "wq": [linear_w(next(keys), hs, C) for _ in range(H)],
        "wk": [linear_w(next(keys), hs, C) for _ in range(H)],
        "wv": [linear_w(next(keys), hs, C) for _ in range(H)],
        "w_proj": linear_w(next(keys), C, C),
        "b_proj": linear_b(next(keys), C, C),
        "ln1_g": 1.0 + 0.1 * jax.random.normal(next(keys), (C,), jnp.float32),
        "ln1_b": 0.1 * jax.random.normal(next(keys), (C,), jnp.float32),
        "ln2_g": 1.0 + 0.1 * jax.random.normal(next(keys), (C,), jnp.float32),
        "ln2_b": 0.1 * jax.random.normal(next(keys), (C,), jnp.float32),
        "w1": linear_w(next(keys), 4 * C, C),
        "b1": linear_b(next(keys), 4 * C, C),
        "w2": linear_w(next(keys), C, 4 * C),
        "b2": linear_b(next(keys), C, 4 * C),
    }

    out = transformer_block_forward(x, params)
    out = jax.block_until_ready(out)

    ref = _reference(x, params)
    assert out.shape == (B, T, C), out.shape
    max_err = float(jnp.max(jnp.abs(out - ref)))
    # Tolerance accounts for bf16 MXU operand casts (softmax reciprocal is exact).
    assert jnp.allclose(out, ref, atol=3e-2, rtol=3e-2), max_err

    print("KERNEL_OK")
</pallas_src>

<mosaic_0001>
module attributes {stable_mosaic.version = 11 : i64} {
  func.func @_transformer_block_kernel(%arg0: i32, %arg1: memref<1x16x64xf32, #tpu.memory_space<vmem>>, %arg2: memref<64x512xbf16, #tpu.memory_space<vmem>>, %arg3: memref<256x64xbf16, #tpu.memory_space<vmem>>, %arg4: memref<1x576xf32, #tpu.memory_space<vmem>>, %arg5: memref<16x16xf32, #tpu.memory_space<vmem>>, %arg6: memref<1x16x64xf32, #tpu.memory_space<vmem>>) attributes {dimension_semantics = [#tpu.dimension_semantics<parallel>], iteration_bounds = array<i64: 2>, scalar_prefetch = 0 : i64, scratch_operands = 0 : i64, tpu.core_type = #tpu.core_type<tc>, window_params = [{transform_indices = @transform_0, window_bounds = array<i64: 1, 16, 64>}, {pipeline_mode = #tpu.pipeline_mode<synchronous>, transform_indices = @transform_1, window_bounds = array<i64: 64, 512>}, {pipeline_mode = #tpu.pipeline_mode<synchronous>, transform_indices = @transform_2, window_bounds = array<i64: 256, 64>}, {pipeline_mode = #tpu.pipeline_mode<synchronous>, transform_indices = @transform_3, window_bounds = array<i64: 1, 576>}, {pipeline_mode = #tpu.pipeline_mode<synchronous>, transform_indices = @transform_4, window_bounds = array<i64: 16, 16>}, {transform_indices = @transform_5, window_bounds = array<i64: 1, 16, 64>}]} {
    %c0 = arith.constant 0 : index
    %c0_0 = arith.constant 0 : index
    %c0_1 = arith.constant 0 : index
    %0 = vector.load %arg1[%c0, %c0_0, %c0_1] : memref<1x16x64xf32, #tpu.memory_space<vmem>>, vector<1x16x64xf32>
    %1 = vector.shape_cast %0 : vector<1x16x64xf32> to vector<16x64xf32>
    %c0_2 = arith.constant 0 : index
    %c0_3 = arith.constant 0 : index
    %2 = vector.load %arg5[%c0_2, %c0_3] : memref<16x16xf32, #tpu.memory_space<vmem>>, vector<16x16xf32>
    %cst = arith.constant dense<0.000000e+00> : vector<16xf32>
    %3 = vector.multi_reduction <add>, %1, %cst [1] : vector<16x64xf32> to vector<16xf32>
    %4 = vector.shape_cast %3 : vector<16xf32> to vector<16x1xf32>
    %cst_4 = arith.constant 6.400000e+01 : f32
    %5 = vector.broadcast %cst_4 : f32 to vector<16x1xf32>
    %6 = arith.divf %4, %5 : vector<16x1xf32>
    %7 = vector.broadcast %6 : vector<16x1xf32> to vector<16x64xf32>
    %8 = arith.subf %1, %7 : vector<16x64xf32>
    %9 = arith.mulf %8, %8 : vector<16x64xf32>
    %cst_5 = arith.constant dense<0.000000e+00> : vector<16xf32>
    %10 = vector.multi_reduction <add>, %9, %cst_5 [1] : vector<16x64xf32> to vector<16xf32>
    %11 = vector.shape_cast %10 : vector<16xf32> to vector<16x1xf32>
    %cst_6 = arith.constant 6.400000e+01 : f32
    %12 = vector.broadcast %cst_6 : f32 to vector<16x1xf32>
    %13 = arith.divf %11, %12 : vector<16x1xf32>
    %cst_7 = arith.constant 9.99999974E-6 : f32
    %14 = vector.broadcast %cst_7 : f32 to vector<16x1xf32>
    %15 = arith.addf %13, %14 : vector<16x1xf32>
    %16 = math.rsqrt %15 : vector<16x1xf32>
    %17 = vector.broadcast %16 : vector<16x1xf32> to vector<16x64xf32>
    %18 = arith.mulf %8, %17 : vector<16x64xf32>
    %19 = arith.truncf %18 : vector<16x64xf32> to vector<16x64xbf16>
    %c0_8 = arith.constant 0 : index
    %c0_9 = arith.constant 0 : index
    %20 = vector.load %arg2[%c0_8, %c0_9] : memref<64x512xbf16, #tpu.memory_space<vmem>>, vector<64x192xbf16>
    %cst_10 = arith.constant dense<0.000000e+00> : vector<16x192xf32>
    %21 = tpu.matmul %19, %20, %cst_10 {dimension_numbers = #tpu.dot_dimension_numbers<[1], [0], [0], [1], [0, 0, 1, 1], [], []>} : vector<16x64xbf16>, vector<64x192xbf16>, vector<16x192xf32> -> vector<16x192xf32>
    %c0_11 = arith.constant 0 : index
    %c0_12 = arith.constant 0 : index
    %22 = vector.load %arg4[%c0_11, %c0_12] : memref<1x576xf32, #tpu.memory_space<vmem>>, vector<1x192xf32>
    %23 = vector.broadcast %22 : vector<1x192xf32> to vector<16x192xf32>
    %24 = arith.addf %21, %23 : vector<16x192xf32>
    %25 = vector.extract_strided_slice %24 {offsets = [0, 0], sizes = [16, 16], strides = [1, 1]} : vector<16x192xf32> to vector<16x16xf32>
    %26 = arith.truncf %25 : vector<16x16xf32> to vector<16x16xbf16>
    %27 = vector.extract_strided_slice %24 {offsets = [0, 64], sizes = [16, 16], strides = [1, 1]} : vector<16x192xf32> to vector<16x16xf32>
    %28 = arith.truncf %27 : vector<16x16xf32> to vector<16x16xbf16>
    %29 = vector.extract_strided_slice %24 {offsets = [0, 128], sizes = [16, 16], strides = [1, 1]} : vector<16x192xf32> to vector<16x16xf32>
    %30 = arith.truncf %29 : vector<16x16xf32> to vector<16x16xbf16>
    %cst_13 = arith.constant dense<0.000000e+00> : vector<16x16xf32>
    %31 = tpu.matmul %26, %28, %cst_13 {dimension_numbers = #tpu.dot_dimension_numbers<[1], [1], [0], [0], [0, 0, 1, 0], [], []>} : vector<16x16xbf16>, vector<16x16xbf16>, vector<16x16xf32> -> vector<16x16xf32>
    %32 = arith.addf %31, %2 : vector<16x16xf32>
    %cst_14 = arith.constant dense<0xFF800000> : vector<16xf32>
    %33 = vector.multi_reduction <maximumf>, %32, %cst_14 [1] : vector<16x16xf32> to vector<16xf32>
    %34 = vector.shape_cast %33 : vector<16xf32> to vector<16x1xf32>
    %35 = vector.broadcast %34 : vector<16x1xf32> to vector<16x16xf32>
    %36 = arith.subf %32, %35 : vector<16x16xf32>
    %37 = math.exp %36 : vector<16x16xf32>
    %cst_15 = arith.constant dense<0.000000e+00> : vector<16xf32>
    %38 = vector.multi_reduction <add>, %37, %cst_15 [1] : vector<16x16xf32> to vector<16xf32>
    %39 = vector.shape_cast %38 : vector<16xf32> to vector<16x1xf32>
    %40 = vector.broadcast %39 : vector<16x1xf32> to vector<16x16xf32>
    %41 = arith.divf %37, %40 : vector<16x16xf32>
    %42 = arith.truncf %41 : vector<16x16xf32> to vector<16x16xbf16>
    %cst_16 = arith.constant dense<0.000000e+00> : vector<16x16xf32>
    %43 = tpu.matmul %42, %30, %cst_16 {dimension_numbers = #tpu.dot_dimension_numbers<[1], [0], [0], [1], [0, 0, 1, 1], [], []>} : vector<16x16xbf16>, vector<16x16xbf16>, vector<16x16xf32> -> vector<16x16xf32>
    %44 = vector.extract_strided_slice %24 {offsets = [0, 16], sizes = [16, 16], strides = [1, 1]} : vector<16x192xf32> to vector<16x16xf32>
    %45 = arith.truncf %44 : vector<16x16xf32> to vector<16x16xbf16>
    %46 = vector.extract_strided_slice %24 {offsets = [0, 80], sizes = [16, 16], strides = [1, 1]} : vector<16x192xf32> to vector<16x16xf32>
    %47 = arith.truncf %46 : vector<16x16xf32> to vector<16x16xbf16>
    %48 = vector.extract_strided_slice %24 {offsets = [0, 144], sizes = [16, 16], strides = [1, 1]} : vector<16x192xf32> to vector<16x16xf32>
    %49 = arith.truncf %48 : vector<16x16xf32> to vector<16x16xbf16>
    %cst_17 = arith.constant dense<0.000000e+00> : vector<16x16xf32>
    %50 = tpu.matmul %45, %47, %cst_17 {dimension_numbers = #tpu.dot_dimension_numbers<[1], [1], [0], [0], [0, 0, 1, 0], [], []>} : vector<16x16xbf16>, vector<16x16xbf16>, vector<16x16xf32> -> vector<16x16xf32>
    %51 = arith.addf %50, %2 : vector<16x16xf32>
    %cst_18 = arith.constant dense<0xFF800000> : vector<16xf32>
    %52 = vector.multi_reduction <maximumf>, %51, %cst_18 [1] : vector<16x16xf32> to vector<16xf32>
    %53 = vector.shape_cast %52 : vector<16xf32> to vector<16x1xf32>
    %54 = vector.broadcast %53 : vector<16x1xf32> to vector<16x16xf32>
    %55 = arith.subf %51, %54 : vector<16x16xf32>
    %56 = math.exp %55 : vector<16x16xf32>
    %cst_19 = arith.constant dense<0.000000e+00> : vector<16xf32>
    %57 = vector.multi_reduction <add>, %56, %cst_19 [1] : vector<16x16xf32> to vector<16xf32>
    %58 = vector.shape_cast %57 : vector<16xf32> to vector<16x1xf32>
    %59 = vector.broadcast %58 : vector<16x1xf32> to vector<16x16xf32>
    %60 = arith.divf %56, %59 : vector<16x16xf32>
    %61 = arith.truncf %60 : vector<16x16xf32> to vector<16x16xbf16>
    %cst_20 = arith.constant dense<0.000000e+00> : vector<16x16xf32>
    %62 = tpu.matmul %61, %49, %cst_20 {dimension_numbers = #tpu.dot_dimension_numbers<[1], [0], [0], [1], [0, 0, 1, 1], [], []>} : vector<16x16xbf16>, vector<16x16xbf16>, vector<16x16xf32> -> vector<16x16xf32>
    %63 = vector.extract_strided_slice %24 {offsets = [0, 32], sizes = [16, 16], strides = [1, 1]} : vector<16x192xf32> to vector<16x16xf32>
    %64 = arith.truncf %63 : vector<16x16xf32> to vector<16x16xbf16>
    %65 = vector.extract_strided_slice %24 {offsets = [0, 96], sizes = [16, 16], strides = [1, 1]} : vector<16x192xf32> to vector<16x16xf32>
    %66 = arith.truncf %65 : vector<16x16xf32> to vector<16x16xbf16>
    %67 = vector.extract_strided_slice %24 {offsets = [0, 160], sizes = [16, 16], strides = [1, 1]} : vector<16x192xf32> to vector<16x16xf32>
    %68 = arith.truncf %67 : vector<16x16xf32> to vector<16x16xbf16>
    %cst_21 = arith.constant dense<0.000000e+00> : vector<16x16xf32>
    %69 = tpu.matmul %64, %66, %cst_21 {dimension_numbers = #tpu.dot_dimension_numbers<[1], [1], [0], [0], [0, 0, 1, 0], [], []>} : vector<16x16xbf16>, vector<16x16xbf16>, vector<16x16xf32> -> vector<16x16xf32>
    %70 = arith.addf %69, %2 : vector<16x16xf32>
    %cst_22 = arith.constant dense<0xFF800000> : vector<16xf32>
    %71 = vector.multi_reduction <maximumf>, %70, %cst_22 [1] : vector<16x16xf32> to vector<16xf32>
    %72 = vector.shape_cast %71 : vector<16xf32> to vector<16x1xf32>
    %73 = vector.broadcast %72 : vector<16x1xf32> to vector<16x16xf32>
    %74 = arith.subf %70, %73 : vector<16x16xf32>
    %75 = math.exp %74 : vector<16x16xf32>
    %cst_23 = arith.constant dense<0.000000e+00> : vector<16xf32>
    %76 = vector.multi_reduction <add>, %75, %cst_23 [1] : vector<16x16xf32> to vector<16xf32>
    %77 = vector.shape_cast %76 : vector<16xf32> to vector<16x1xf32>
    %78 = vector.broadcast %77 : vector<16x1xf32> to vector<16x16xf32>
    %79 = arith.divf %75, %78 : vector<16x16xf32>
    %80 = arith.truncf %79 : vector<16x16xf32> to vector<16x16xbf16>
    %cst_24 = arith.constant dense<0.000000e+00> : vector<16x16xf32>
    %81 = tpu.matmul %80, %68, %cst_24 {dimension_numbers = #tpu.dot_dimension_numbers<[1], [0], [0], [1], [0, 0, 1, 1], [], []>} : vector<16x16xbf16>, vector<16x16xbf16>, vector<16x16xf32> -> vector<16x16xf32>
    %82 = vector.extract_strided_slice %24 {offsets = [0, 48], sizes = [16, 16], strides = [1, 1]} : vector<16x192xf32> to vector<16x16xf32>
    %83 = arith.truncf %82 : vector<16x16xf32> to vector<16x16xbf16>
    %84 = vector.extract_strided_slice %24 {offsets = [0, 112], sizes = [16, 16], strides = [1, 1]} : vector<16x192xf32> to vector<16x16xf32>
    %85 = arith.truncf %84 : vector<16x16xf32> to vector<16x16xbf16>
    %86 = vector.extract_strided_slice %24 {offsets = [0, 176], sizes = [16, 16], strides = [1, 1]} : vector<16x192xf32> to vector<16x16xf32>
    %87 = arith.truncf %86 : vector<16x16xf32> to vector<16x16xbf16>
    %cst_25 = arith.constant dense<0.000000e+00> : vector<16x16xf32>
    %88 = tpu.matmul %83, %85, %cst_25 {dimension_numbers = #tpu.dot_dimension_numbers<[1], [1], [0], [0], [0, 0, 1, 0], [], []>} : vector<16x16xbf16>, vector<16x16xbf16>, vector<16x16xf32> -> vector<16x16xf32>
    %89 = arith.addf %88, %2 : vector<16x16xf32>
    %cst_26 = arith.constant dense<0xFF800000> : vector<16xf32>
    %90 = vector.multi_reduction <maximumf>, %89, %cst_26 [1] : vector<16x16xf32> to vector<16xf32>
    %91 = vector.shape_cast %90 : vector<16xf32> to vector<16x1xf32>
    %92 = vector.broadcast %91 : vector<16x1xf32> to vector<16x16xf32>
    %93 = arith.subf %89, %92 : vector<16x16xf32>
    %94 = math.exp %93 : vector<16x16xf32>
    %cst_27 = arith.constant dense<0.000000e+00> : vector<16xf32>
    %95 = vector.multi_reduction <add>, %94, %cst_27 [1] : vector<16x16xf32> to vector<16xf32>
    %96 = vector.shape_cast %95 : vector<16xf32> to vector<16x1xf32>
    %97 = vector.broadcast %96 : vector<16x1xf32> to vector<16x16xf32>
    %98 = arith.divf %94, %97 : vector<16x16xf32>
    %99 = arith.truncf %98 : vector<16x16xf32> to vector<16x16xbf16>
    %cst_28 = arith.constant dense<0.000000e+00> : vector<16x16xf32>
    %100 = tpu.matmul %99, %87, %cst_28 {dimension_numbers = #tpu.dot_dimension_numbers<[1], [0], [0], [1], [0, 0, 1, 1], [], []>} : vector<16x16xbf16>, vector<16x16xbf16>, vector<16x16xf32> -> vector<16x16xf32>
    %101 = tpu.concatenate %43, %62, %81, %100 in 1 : vector<16x16xf32>, vector<16x16xf32>, vector<16x16xf32>, vector<16x16xf32> -> vector<16x64xf32>
    %102 = arith.truncf %101 : vector<16x64xf32> to vector<16x64xbf16>
    %c0_29 = arith.constant 0 : index
    %c192 = arith.constant 192 : index
    %103 = vector.load %arg2[%c0_29, %c192] : memref<64x512xbf16, #tpu.memory_space<vmem>>, vector<64x64xbf16>
    %cst_30 = arith.constant dense<0.000000e+00> : vector<16x64xf32>
    %104 = tpu.matmul %102, %103, %cst_30 {dimension_numbers = #tpu.dot_dimension_numbers<[1], [0], [0], [1], [0, 0, 1, 1], [], []>} : vector<16x64xbf16>, vector<64x64xbf16>, vector<16x64xf32> -> vector<16x64xf32>
    %105 = arith.addf %1, %104 : vector<16x64xf32>
    %c0_31 = arith.constant 0 : index
    %c192_32 = arith.constant 192 : index
    %106 = vector.load %arg4[%c0_31, %c192_32] : memref<1x576xf32, #tpu.memory_space<vmem>>, vector<1x64xf32>
    %107 = vector.broadcast %106 : vector<1x64xf32> to vector<16x64xf32>
    %108 = arith.addf %105, %107 : vector<16x64xf32>
    %cst_33 = arith.constant dense<0.000000e+00> : vector<16xf32>
    %109 = vector.multi_reduction <add>, %108, %cst_33 [1] : vector<16x64xf32> to vector<16xf32>
    %110 = vector.shape_cast %109 : vector<16xf32> to vector<16x1xf32>
    %cst_34 = arith.constant 6.400000e+01 : f32
    %111 = vector.broadcast %cst_34 : f32 to vector<16x1xf32>
    %112 = arith.divf %110, %111 : vector<16x1xf32>
    %113 = vector.broadcast %112 : vector<16x1xf32> to vector<16x64xf32>
    %114 = arith.subf %108, %113 : vector<16x64xf32>
    %115 = arith.mulf %114, %114 : vector<16x64xf32>
    %cst_35 = arith.constant dense<0.000000e+00> : vector<16xf32>
    %116 = vector.multi_reduction <add>, %115, %cst_35 [1] : vector<16x64xf32> to vector<16xf32>
    %117 = vector.shape_cast %116 : vector<16xf32> to vector<16x1xf32>
    %cst_36 = arith.constant 6.400000e+01 : f32
    %118 = vector.broadcast %cst_36 : f32 to vector<16x1xf32>
    %119 = arith.divf %117, %118 : vector<16x1xf32>
    %cst_37 = arith.constant 9.99999974E-6 : f32
    %120 = vector.broadcast %cst_37 : f32 to vector<16x1xf32>
    %121 = arith.addf %119, %120 : vector<16x1xf32>
    %122 = math.rsqrt %121 : vector<16x1xf32>
    %123 = vector.broadcast %122 : vector<16x1xf32> to vector<16x64xf32>
    %124 = arith.mulf %114, %123 : vector<16x64xf32>
    %125 = arith.truncf %124 : vector<16x64xf32> to vector<16x64xbf16>
    %c0_38 = arith.constant 0 : index
    %c256 = arith.constant 256 : index
    %126 = vector.load %arg2[%c0_38, %c256] : memref<64x512xbf16, #tpu.memory_space<vmem>>, vector<64x256xbf16>
    %cst_39 = arith.constant dense<0.000000e+00> : vector<16x256xf32>
    %127 = tpu.matmul %125, %126, %cst_39 {dimension_numbers = #tpu.dot_dimension_numbers<[1], [0], [0], [1], [0, 0, 1, 1], [], []>} : vector<16x64xbf16>, vector<64x256xbf16>, vector<16x256xf32> -> vector<16x256xf32>
    %c0_40 = arith.constant 0 : index
    %c256_41 = arith.constant 256 : index
    %128 = vector.load %arg4[%c0_40, %c256_41] : memref<1x576xf32, #tpu.memory_space<vmem>>, vector<1x256xf32>
    %129 = vector.broadcast %128 : vector<1x256xf32> to vector<16x256xf32>
    %130 = arith.addf %127, %129 : vector<16x256xf32>
    %cst_42 = arith.constant 0.000000e+00 : f32
    %131 = vector.broadcast %cst_42 : f32 to vector<16x256xf32>
    %132 = arith.maximumf %130, %131 : vector<16x256xf32>
    %133 = arith.truncf %132 : vector<16x256xf32> to vector<16x256xbf16>
    %c0_43 = arith.constant 0 : index
    %c0_44 = arith.constant 0 : index
    %134 = vector.load %arg3[%c0_43, %c0_44] : memref<256x64xbf16, #tpu.memory_space<vmem>>, vector<256x64xbf16>
    %cst_45 = arith.constant dense<0.000000e+00> : vector<16x64xf32>
    %135 = tpu.matmul %133, %134, %cst_45 {dimension_numbers = #tpu.dot_dimension_numbers<[1], [0], [0], [1], [0, 0, 1, 1], [], []>} : vector<16x256xbf16>, vector<256x64xbf16>, vector<16x64xf32> -> vector<16x64xf32>
    %c0_46 = arith.constant 0 : index
    %c512 = arith.constant 512 : index
    %136 = vector.load %arg4[%c0_46, %c512] : memref<1x576xf32, #tpu.memory_space<vmem>>, vector<1x64xf32>
    %137 = vector.broadcast %136 : vector<1x64xf32> to vector<16x64xf32>
    %138 = arith.addf %135, %137 : vector<16x64xf32>
    %139 = arith.addf %108, %138 : vector<16x64xf32>
    %c0_47 = arith.constant 0 : index
    %c0_48 = arith.constant 0 : index
    %c0_49 = arith.constant 0 : index
    %140 = vector.load %arg6[%c0_47, %c0_48, %c0_49] : memref<1x16x64xf32, #tpu.memory_space<vmem>>, vector<1x16x64xf32>
    %141 = vector.shape_cast %140 : vector<1x16x64xf32> to vector<16x64xf32>
    %142 = vector.shape_cast %139 : vector<16x64xf32> to vector<1x16x64xf32>
    tpu.vector_store %arg6[%c0_47, %c0_48, %c0_49], %142 {strides = array<i32>} : memref<1x16x64xf32, #tpu.memory_space<vmem>>, vector<1x16x64xf32>,
    return
  }
  func.func @transform_0(%arg0: i32) -> (i32, i32, i32) {
    %c0_i32 = arith.constant 0 : i32
    %c0_i32_0 = arith.constant 0 : i32
    %c0_i32_1 = arith.constant 0 : i32
    return %arg0, %c0_i32, %c0_i32_0 : i32, i32, i32
  }
  func.func @transform_1(%arg0: i32) -> (i32, i32) {
    %c0_i32 = arith.constant 0 : i32
    %c0_i32_0 = arith.constant 0 : i32
    %c0_i32_1 = arith.constant 0 : i32
    return %c0_i32, %c0_i32_0 : i32, i32
  }
  func.func @transform_2(%arg0: i32) -> (i32, i32) {
    %c0_i32 = arith.constant 0 : i32
    %c0_i32_0 = arith.constant 0 : i32
    %c0_i32_1 = arith.constant 0 : i32
    return %c0_i32, %c0_i32_0 : i32, i32
  }
  func.func @transform_3(%arg0: i32) -> (i32, i32) {
    %c0_i32 = arith.constant 0 : i32
    %c0_i32_0 = arith.constant 0 : i32
    %c0_i32_1 = arith.constant 0 : i32
    return %c0_i32, %c0_i32_0 : i32, i32
  }
  func.func @transform_4(%arg0: i32) -> (i32, i32) {
    %c0_i32 = arith.constant 0 : i32
    %c0_i32_0 = arith.constant 0 : i32
    %c0_i32_1 = arith.constant 0 : i32
    return %c0_i32, %c0_i32_0 : i32, i32
  }
  func.func @transform_5(%arg0: i32) -> (i32, i32, i32) {
    %c0_i32 = arith.constant 0 : i32
    %c0_i32_0 = arith.constant 0 : i32
    %c0_i32_1 = arith.constant 0 : i32
    return %arg0, %c0_i32, %c0_i32_0 : i32, i32, i32
  }
}

</mosaic_0001>

<llo_original>
// kernel: tpu_custom_call.1
$region0: #{tpu_custom_call.1}
  #allocation0 [shape = 'u32[]', space=smem, size = 0x4, offset = 0x4, fixed_abs, tag = 'smem constant byte address 0x4 - core index']
  #allocation1 [shape = 'u32[144,128]{1,0:T(1,128)}', space=vmem, size = 0x12000, scoped, tag = 'internal scratch']
  %s0 = inlined_call_operand.vmem [shape: f32[2,16,64], index: 0, kind: input, shape index: {}]
  %s1 = inlined_call_operand.vmem [shape: bf16[64,512], index: 1, kind: input, shape index: {}]
  %s2 = inlined_call_operand.vmem [shape: bf16[256,64], index: 2, kind: input, shape index: {}]
  %s3 = inlined_call_operand.vmem [shape: f32[1,576], index: 3, kind: input, shape index: {}]
  %s4 = inlined_call_operand.vmem [shape: f32[16,16], index: 4, kind: input, shape index: {}]
  %s5 = inlined_call_operand.hbm [shape: f32[2,16,64], index: 5, kind: output, shape index: {}]
  %s6 = sld [smem:[#allocation0]]
  $region53: #{tpu_custom_call.1} parent=0
    _
  %s8 = ssub.s32 1, %s6
  %s9 = scalar_select 0, %s8, %s6
  $region1: #{tpu_custom_call.1} parent=0
    #allocation2 [shape = 'u8[16384]{0}', space=vmem, size = 0x4000, scoped, tag = 'output window, operand 0']
    #allocation3 [shape = 's32[2]{0}', space=sflag, size = 0x8, scoped, tag = 'scoped memory for tpu_custom_call.1']
    %10 = vsyncpa [#allocation3], 0
    %s11 = scalar_lea.sflag [#allocation3], 1
    %12 = vsyncpa %s11, 0
    loop: start=0, step=1, limit=4
    $region2: #{tpu_custom_call.1} parent=1 // loop_pre_header
      _
    $region3: #{tpu_custom_call.1} parent=1 // loop_header
      %s14 = sphi 0, %s18
      %p15 = scmp.ge.s32.totalorder %s14, 4
      %s24 = sphi 0, %s26
      %s27 = sphi 0, %s24
      %s28 = sphi 0, %s27
      %s44 = sphi 0, %s28
      %s48 = sphi 0, %s48
      %s50 = sphi 0, %s48
      %s51 = sphi 0, %s50
      %s65 = sphi 0, %s51
      %s69 = sphi 0, %s69
      %s71 = sphi 0, %s69
      %s72 = sphi 0, %s71
      %s86 = sphi 0, %s72
      %s90 = sphi 0, %s90
      %s92 = sphi 0, %s90
      %s93 = sphi 0, %s92
      %s107 = sphi 0, %s93
      %s111 = sphi 0, %s111
      %s113 = sphi 0, %s111
      %s114 = sphi 0, %s113
      %s128 = sphi 0, %s114
      %s134 = sphi 0, %s136
      %s137 = sphi 0, %s134
      %s138 = sphi 0, %s137
      %s154 = sphi 0, %s138
    $region4: #{tpu_custom_call.1} parent=1 // loop_header_branch
      %17 = sbr.rel (%p15) target = $region8
    $region5: #{tpu_custom_call.1} parent=1 // loop_body
      %s19 = ssub.s32 %s14, 1
      %s20 = ssub.s32 %s14, 2
      %s21 = sadd.s32 %s14, 1
      %s22 = ssub.s32 %s14, %s21
      %p23 = scmp.eq.s32.totalorder %s22, 0
      %s25 = sadd.s32 %s24, 1
      %s26 = scalar_select %p23, %s24, %s25
      %p29 = pneg %p23
      %p30 = scmp.eq.s32.totalorder %s14, 1
      %p31 = por %p29, %p30
      %p32 = scmp.ne.s32.totalorder %s24, %s27
      %p33 = scmp.eq.s32.totalorder %s14, 0
      %p34 = por %p32, %p33
      %p35 = scmp.ne.s32.totalorder %s24, %s27
      %p36 = scmp.eq.s32.totalorder %s19, 1
      %p37 = por %p35, %p36
      %p38 = scmp.ne.s32.totalorder %s27, %s28
      %p39 = scmp.eq.s32.totalorder %s19, 0
      %p40 = por %p38, %p39
      %p41 = scmp.ne.s32.totalorder %s27, %s28
      %p42 = scmp.eq.s32.totalorder %s20, 1
      %p43 = por %p41, %p42
      %p45 = scmp.ne.s32.totalorder %s28, %s44
      %p46 = scmp.eq.s32.totalorder %s20, 0
      %p47 = por %p45, %p46
      %s49 = sadd.s32 %s48, 1
      %p52 = scmp.eq.s32.totalorder %s14, 1
      %p53 = scmp.ne.s32.totalorder %s48, %s50
      %p54 = scmp.eq.s32.totalorder %s14, 0
      %p55 = por %p53, %p54
      %p56 = scmp.ne.s32.totalorder %s48, %s50
      %p57 = scmp.eq.s32.totalorder %s19, 1
      %p58 = por %p56, %p57
      %p59 = scmp.ne.s32.totalorder %s50, %s51
      %p60 = scmp.eq.s32.totalorder %s19, 0
      %p61 = por %p59, %p60
      %p62 = scmp.ne.s32.totalorder %s50, %s51
      %p63 = scmp.eq.s32.totalorder %s20, 1
      %p64 = por %p62, %p63
      %p66 = scmp.ne.s32.totalorder %s51, %s65
      %p67 = scmp.eq.s32.totalorder %s20, 0
      %p68 = por %p66, %p67
      %s70 = sadd.s32 %s69, 1
      %p73 = scmp.eq.s32.totalorder %s14, 1
      %p74 = scmp.ne.s32.totalorder %s69, %s71
      %p75 = scmp.eq.s32.totalorder %s14, 0
      %p76 = por %p74, %p75
      %p77 = scmp.ne.s32.totalorder %s69, %s71
      %p78 = scmp.eq.s32.totalorder %s19, 1
      %p79 = por %p77, %p78
      %p80 = scmp.ne.s32.totalorder %s71, %s72
      %p81 = scmp.eq.s32.totalorder %s19, 0
      %p82 = por %p80, %p81
      %p83 = scmp.ne.s32.totalorder %s71, %s72
      %p84 = scmp.eq.s32.totalorder %s20, 1
      %p85 = por %p83, %p84
      %p87 = scmp.ne.s32.totalorder %s72, %s86
      %p88 = scmp.eq.s32.totalorder %s20, 0
      %p89 = por %p87, %p88
      %s91 = sadd.s32 %s90, 1
      %p94 = scmp.eq.s32.totalorder %s14, 1
      %p95 = scmp.ne.s32.totalorder %s90, %s92
      %p96 = scmp.eq.s32.totalorder %s14, 0
      %p97 = por %p95, %p96
      %p98 = scmp.ne.s32.totalorder %s90, %s92
      %p99 = scmp.eq.s32.totalorder %s19, 1
      %p100 = por %p98, %p99
      %p101 = scmp.ne.s32.totalorder %s92, %s93
      %p102 = scmp.eq.s32.totalorder %s19, 0
      %p103 = por %p101, %p102
      %p104 = scmp.ne.s32.totalorder %s92, %s93
      %p105 = scmp.eq.s32.totalorder %s20, 1
      %p106 = por %p104, %p105
      %p108 = scmp.ne.s32.totalorder %s93, %s107
      %p109 = scmp.eq.s32.totalorder %s20, 0
      %p110 = por %p108, %p109
      %s112 = sadd.s32 %s111, 1
      %p115 = scmp.eq.s32.totalorder %s14, 1
      %p116 = scmp.ne.s32.totalorder %s111, %s113
      %p117 = scmp.eq.s32.totalorder %s14, 0
      %p118 = por %p116, %p117
      %p119 = scmp.ne.s32.totalorder %s111, %s113
      %p120 = scmp.eq.s32.totalorder %s19, 1
      %p121 = por %p119, %p120
      %p122 = scmp.ne.s32.totalorder %s113, %s114
      %p123 = scmp.eq.s32.totalorder %s19, 0
      %p124 = por %p122, %p123
      %p125 = scmp.ne.s32.totalorder %s113, %s114
      %p126 = scmp.eq.s32.totalorder %s20, 1
      %p127 = por %p125, %p126
      %p129 = scmp.ne.s32.totalorder %s114, %s128
      %p130 = scmp.eq.s32.totalorder %s20, 0
      %p131 = por %p129, %p130
      %s132 = ssub.s32 %s14, %s21
      %p133 = scmp.eq.s32.totalorder %s132, 0
      %s135 = sadd.s32 %s134, 1
      %s136 = scalar_select %p133, %s134, %s135
      %p139 = pneg %p133
      %p140 = scmp.eq.s32.totalorder %s14, 1
      %p141 = por %p139, %p140
      %p142 = scmp.ne.s32.totalorder %s134, %s137
      %p143 = scmp.eq.s32.totalorder %s14, 0
      %p144 = por %p142, %p143
      %p145 = scmp.ne.s32.totalorder %s134, %s137
      %p146 = scmp.eq.s32.totalorder %s19, 1
      %p147 = por %p145, %p146
      %p148 = scmp.ne.s32.totalorder %s137, %s138
      %p149 = scmp.eq.s32.totalorder %s19, 0
      %p150 = por %p148, %p149
      %p151 = scmp.ne.s32.totalorder %s137, %s138
      %p152 = scmp.eq.s32.totalorder %s20, 1
      %p153 = por %p151, %p152
      %p155 = scmp.ne.s32.totalorder %s138, %s154
      %p156 = scmp.eq.s32.totalorder %s20, 0
      %p157 = por %p155, %p156
      %p158 = scmp.le.s32.totalorder 1, %s14
      %p159 = scmp.lt.s32.totalorder %s14, 3
      %p160 = pnand %p158, %p159
      %p161 = pneg %p160
      // Predicated region
      $region9: #{tpu_custom_call.1} parent=5 // pred_check
        _
      $region10: #{tpu_custom_call.1} parent=5 // pred_check_branch
        %163 = sbr.rel (%p160) target = $region12
      $region11: #{tpu_custom_call.1} parent=5 // pred_region
        %s164 = ssub.s32 %s14, 1
        // Predicated region
        $region13: #{tpu_custom_call.1} parent=11 // pred_check
          %p165 = pneg %p61
        $region14: #{tpu_custom_call.1} parent=11 // pred_check_branch
          %167 = sbr.rel (%p165) target = $region16
        $region15: #{tpu_custom_call.1} parent=11 // pred_region
          _
        $region16: #{tpu_custom_call.1} parent=11 // pred_fallthru
          _
        // Predicated region
        $region17: #{tpu_custom_call.1} parent=11 // pred_check
          %p168 = pneg %p82
        $region18: #{tpu_custom_call.1} parent=11 // pred_check_branch
          %170 = sbr.rel (%p168) target = $region20
        $region19: #{tpu_custom_call.1} parent=11 // pred_region
          _
        $region20: #{tpu_custom_call.1} parent=11 // pred_fallthru
          _
        // Predicated region
        $region21: #{tpu_custom_call.1} parent=11 // pred_check
          %p171 = pneg %p103
        $region22: #{tpu_custom_call.1} parent=11 // pred_check_branch
          %173 = sbr.rel (%p171) target = $region24
        $region23: #{tpu_custom_call.1} parent=11 // pred_region
          _
        $region24: #{tpu_custom_call.1} parent=11 // pred_fallthru
          _
        // Predicated region
        $region25: #{tpu_custom_call.1} parent=11 // pred_check
          %p174 = pneg %p124
        $region26: #{tpu_custom_call.1} parent=11 // pred_check_branch
          %176 = sbr.rel (%p174) target = $region28
        $region27: #{tpu_custom_call.1} parent=11 // pred_region
          _
        $region28: #{tpu_custom_call.1} parent=11 // pred_fallthru
          _
      $region12: #{tpu_custom_call.1} parent=5 // pred_fallthru
        _
      %p177 = scmp.lt.s32.totalorder %s14, 2
      // Predicated region
      $region29: #{tpu_custom_call.1} parent=5 // pred_check
        %p178 = pneg %p177
      $region30: #{tpu_custom_call.1} parent=5 // pred_check_branch
        %180 = sbr.rel (%p178) target = $region32
      $region31: #{tpu_custom_call.1} parent=5 // pred_region
        // Predicated region
        $region33: #{tpu_custom_call.1} parent=31 // pred_check
          %p181 = pneg %p34
        $region34: #{tpu_custom_call.1} parent=31 // pred_check_branch
          %183 = sbr.rel (%p181) target = $region36
        $region35: #{tpu_custom_call.1} parent=31 // pred_region
          %p184 = scmp.lt.s32.totalorder %s14, 1
          %s185 = scalar_select %p184, %s14, 1
          %s186 = smul.addr %s185, 2
          %s187 = smul.addr %s186, 8
          %s188 = scalar_lea.vmem %s0, %s187
        $region36: #{tpu_custom_call.1} parent=31 // pred_fallthru
          _
      $region32: #{tpu_custom_call.1} parent=5 // pred_fallthru
        _
      %p189 = scmp.le.s32.totalorder 1, %s14
      %p190 = scmp.lt.s32.totalorder %s14, 3
      %p191 = pnand %p189, %p190
      %p192 = pneg %p191
      // Predicated region
      $region37: #{tpu_custom_call.1} parent=5 // pred_check
        _
      $region38: #{tpu_custom_call.1} parent=5 // pred_check_branch
        %194 = sbr.rel (%p191) target = $region40
      $region39: #{tpu_custom_call.1} parent=5 // pred_region
        %s195 = ssub.s32 %s14, 1
        %p196 = scmp.lt.s32.totalorder %s19, 1
        %s197 = scalar_select %p196, %s19, 1
        %s198 = smul.addr %s197, 2
        %s199 = smul.addr %s198, 8
        %s200 = scalar_lea.vmem %s0, %s199
        %p201 = pneg %p40
        %p202 = pneg %p37
        %p203 = pneg %p61
        %p204 = pneg %p58
        %p205 = pneg %p82
        %p206 = pneg %p79
        %p207 = pneg %p103
        %p208 = pneg %p100
        %p209 = pneg %p124
        %p210 = pneg %p121
        %p211 = pneg %p150
        %p212 = pneg %p147
        %s213 = sand.u32 %s137, 1
        %s214 = scalar_lea.sflag [#allocation3], %s213
        %s215 = sand.u32 %s137, 1
        %s216 = smul.addr %s215, 16
        %s217 = scalar_lea.vmem [#allocation2], %s216
        %p218 = scmp.lt.s32.totalorder %s19, 1
        %s219 = scalar_select %p218, %s19, 1
        %s220 = smul.addr %s219, 2
        %s221 = smul.addr %s220, 8
        %s222 = scalar_lea.vmem %s0, %s221
        %v224 = vld [vmem:[%s222] sm:$0xff]
        %v225 = vld [vmem:[%s222 + $0x8] sm:$0xff]
        %v226 = vld [vmem:[%s4] sm:$0xff]
        %v227 = vld [vmem:[%s4 + $0x8] sm:$0xff]
        %vm228 = vcmask 523264
        %v229 = vsel %vm228, %v224, 0.0
        %230 = vadd.xlane.f32.xlu0 %v229
        %v231 = vpop.xlane.xlu0 %230
        %v232 = vsel %vm228, %v225, 0.0
        %233 = vadd.xlane.f32.xlu0 %v232
        %v234 = vpop.xlane.xlu0 %233
        %v235 = vrcp.pop 64.0
        %v236 = vmul.f32 %v231, %v235
        %v237 = vmul.f32 %v234, %v235
        %v238 = vsub.f32 %v224, %v236
        %v239 = vsub.f32 %v225, %v237
        %v240 = vmul.f32 %v238, %v238
        %v241 = vmul.f32 %v239, %v239
        %v242 = vsel %vm228, %v240, 0.0
        %243 = vadd.xlane.f32.xlu0 %v242
        %v244 = vpop.xlane.xlu0 %243
        %v245 = vsel %vm228, %v241, 0.0
        %246 = vadd.xlane.f32.xlu0 %v245
        %v247 = vpop.xlane.xlu0 %246
        %v248 = vmul.f32 %v244, %v235
        %v249 = vmul.f32 %v247, %v235
        %v250 = vadd.f32 %v248, 1e-05
        %v251 = vadd.f32 %v249, 1e-05
        %v252 = vrsqrt.pop %v250
        %v253 = vrsqrt.pop %v251
        %v254 = vmul.f32 %v238, %v252
        %v255 = vmul.f32 %v239, %v253
        %v256 = vpack.c.bf16 %v255, %v254
        %v257 = vld [vmem:[%s1] sm:$0xff]
        %v258 = vld [vmem:[%s1 + $0x10] sm:$0xff]
        %v259 = vld [vmem:[%s1 + $0x20] sm:$0xff]
        %v260 = vld [vmem:[%s1 + $0x30] sm:$0xff]
        %v261 = vld [vmem:[%s1 + $0x40] sm:$0xff]
        %v262 = vld [vmem:[%s1 + $0x50] sm:$0xff]
        %v263 = vld [vmem:[%s1 + $0x60] sm:$0xff]
        %v264 = vld [vmem:[%s1 + $0x70] sm:$0xff]
        %v265 = vld [vmem:[%s3] sm:$0x3]
        %v267 = vlaneseq
        %v268 = vshrl.u32 %v267, 7
        %v269 = vsub.s32 0, %v268
        %v270 = vrot.slane %v265, %v269
        %v271 = vlaneseq
        %v272 = vshrl.u32 %v271, 7
        %v273 = vsub.s32 1, %v272
        %v274 = vrot.slane %v265, %v273
        %v285 = vunpack.c.l.b16 %v257
        %v286 = vunpack.c.h.b16 %v257
        %v287 = vunpack.c.l.b16 %v258
        %v288 = vunpack.c.h.b16 %v258
        %v289 = vunpack.c.l.b16 %v259
        %v290 = vunpack.c.h.b16 %v259
        %v291 = vunpack.c.l.b16 %v260
        %v292 = vunpack.c.h.b16 %v260
        %v293 = vunpack.c.l.b16 %v261
        %v294 = vunpack.c.h.b16 %v261
        %v295 = vunpack.c.l.b16 %v262
        %v296 = vunpack.c.h.b16 %v262
        %v297 = vunpack.c.l.b16 %v263
        %v298 = vunpack.c.h.b16 %v263
        %v299 = vunpack.c.l.b16 %v264
        %v300 = vunpack.c.h.b16 %v264
        %v301 = vpack.c.b16 %v287, %v285
        %v302 = vpack.c.b16 %v288, %v286
        %v303 = vpack.c.b16 %v291, %v289
        %v304 = vpack.c.b16 %v292, %v290
        %v305 = vpack.c.b16 %v295, %v293
        %v306 = vpack.c.b16 %v296, %v294
        %v307 = vpack.c.b16 %v299, %v297
        %v308 = vpack.c.b16 %v300, %v298
        %v318 = vsel %vm228, %v256, 0
        %320 = vmatprep.subr.bf16.mxu0 %v302
        %321 = vmatpush1.bf16.msra.mxu0 %v301
        %322 = vmatprep.subr.bf16.mxu0 %v304
        %323 = vmatpush1.bf16.msra.mxu0 %v303
        %324 = vmatprep.subr.bf16.mxu0 %v306
        %325 = vmatpush1.bf16.msra.mxu0 %v305
        %326 = vmatprep.subr.bf16.mxu0 %v308
        %327 = vmatpush1.bf16.msra.mxu0 %v307
        %328 = vmatprep.subr.bf16.mxu0 0
        %329 = vmatpush1.bf16.msra.mxu0 0
        %330 = vmatprep.subr.bf16.mxu0 0
        %331 = vmatpush1.bf16.msra.mxu0 0
        %332 = vmatprep.subr.bf16.mxu0 0
        %333 = vmatpush1.bf16.msra.mxu0 0
        %334 = vmatprep.subr.bf16.mxu0 0
        %335 = vmatpush1.bf16.msra.mxu0 0
        %336 = vmatprep.subr.bf16.mxu0 0
        %337 = vmatpush1.bf16.msra.mxu0 0
        %338 = vmatprep.subr.bf16.mxu0 0
        %339 = vmatpush1.bf16.msra.mxu0 0
        %340 = vmatprep.subr.bf16.mxu0 0
        %341 = vmatpush1.bf16.msra.mxu0 0
        %342 = vmatprep.subr.bf16.mxu0 0
        %343 = vmatpush1.bf16.msra.mxu0 0
        %344 = vmatprep.subr.bf16.mxu0 0
        %345 = vmatpush1.bf16.msra.mxu0 0
        %346 = vmatprep.subr.bf16.mxu0 0
        %347 = vmatpush1.bf16.msra.mxu0 0
        %348 = vmatprep.subr.bf16.mxu0 0
        %349 = vmatpush1.bf16.msra.mxu0 0
        %350 = vmatprep.subr.bf16.mxu0 0
        %351 = vmatpush1.bf16.msra.mxu0 0
        %352 = vmatprep.mubr.bf16.mxu0 0
        %353 = vmatmul.mubr.bf16.gmra.mrb[0].mxu0 %v318
        %v354 = vpop.f32.mrb[0].mxu0
        %v355 = vadd.f32 %v270, %v354
        %v356 = vpop.f32.mrb[0].mxu0
        %v357 = vadd.f32 %v274, %v356
        %v358 = vpop.f32.mrb[0].mxu0
        %v359 = vadd.f32 %v270, %v358
        %v360 = vpop.f32.mrb[0].mxu0
        %v361 = vadd.f32 %v274, %v360
        %362 = vdwg.mxu0
        %v363 = vpack.c.bf16 %v359, %v355
        %v364 = vpack.c.bf16 %v361, %v357
        %366 = vrot.lane.b32.xlu0 %v363, 64
        %v367 = vpop.permute.xlu0 %366
        %vm368 = vcmask 130048
        %v370 = vsel %vm368, %v363, 0
        %v373 = vsel %vm368, %v367, 0
        %375 = vmatprep.subr.bf16.mxu0 0
        %376 = vmatpush1.bf16.xpose.msra.mxu0 %v373
        %377 = vmatprep.subr.bf16.mxu0 0
        %378 = vmatpush1.bf16.xpose.msra.mxu0 0
        %379 = vmatprep.subr.bf16.mxu0 0
        %380 = vmatpush1.bf16.xpose.msra.mxu0 0
        %381 = vmatprep.subr.bf16.mxu0 0
        %382 = vmatpush1.bf16.xpose.msra.mxu0 0
        %383 = vmatprep.subr.bf16.mxu0 0
        %384 = vmatpush1.bf16.xpose.msra.mxu0 0
        %385 = vmatprep.subr.bf16.mxu0 0
        %386 = vmatpush1.bf16.xpose.msra.mxu0 0
        %387 = vmatprep.subr.bf16.mxu0 0
        %388 = vmatpush1.bf16.xpose.msra.mxu0 0
        %389 = vmatprep.subr.bf16.mxu0 0
        %390 = vmatpush1.bf16.xpose.msra.mxu0 0
        %391 = vmatprep.subr.bf16.mxu0 0
        %392 = vmatpush1.bf16.xpose.msra.mxu0 0
        %393 = vmatprep.subr.bf16.mxu0 0
        %394 = vmatpush1.bf16.xpose.msra.mxu0 0
        %395 = vmatprep.subr.bf16.mxu0 0
        %396 = vmatpush1.bf16.xpose.msra.mxu0 0
        %397 = vmatprep.subr.bf16.mxu0 0
        %398 = vmatpush1.bf16.xpose.msra.mxu0 0
        %399 = vmatprep.subr.bf16.mxu0 0
        %400 = vmatpush1.bf16.xpose.msra.mxu0 0
        %401 = vmatprep.subr.bf16.mxu0 0
        %402 = vmatpush1.bf16.xpose.msra.mxu0 0
        %403 = vmatprep.subr.bf16.mxu0 0
        %404 = vmatpush1.bf16.xpose.msra.mxu0 0
        %405 = vmatprep.subr.bf16.mxu0 0
        %406 = vmatpush1.bf16.xpose.msra.mxu0 0
        %407 = vmatprep.mubr.bf16.mxu0 0
        %408 = vmatmul.mubr.bf16.gmra.mrb[0].mxu0 %v370
        %v409 = vpop.f32.mrb[0].mxu0
        %v410 = vadd.f32 %v226, %v409
        %v411 = vpop.f32.mrb[0].mxu0
        %v412 = vpop.f32.mrb[0].mxu0
        %v413 = vadd.f32 %v227, %v412
        %v414 = vpop.f32.mrb[0].mxu0
        %415 = vdwg.mxu0
        %v416 = vsel %vm368, %v410, -inf
        %417 = vmax.xlane.f32.xlu0 %v416
        %v418 = vpop.xlane.xlu0 %417
        %v419 = vsel %vm368, %v413, -inf
        %420 = vmax.xlane.f32.xlu0 %v419
        %v421 = vpop.xlane.xlu0 %420
        %v422 = vsub.f32 %v410, %v418
        %v423 = vsub.f32 %v413, %v421
        %v424 = vmul.f32 %v422, 1.442695
        %v425 = vpow.pop %v424
        %v426 = vmul.f32 %v423, 1.442695
        %v427 = vpow.pop %v426
        %v428 = vsel %vm368, %v425, 0.0
        %429 = vadd.xlane.f32.xlu0 %v428
        %v430 = vpop.xlane.xlu0 %429
        %v431 = vsel %vm368, %v427, 0.0
        %432 = vadd.xlane.f32.xlu0 %v431
        %v433 = vpop.xlane.xlu0 %432
        %v434 = vrcp.pop %v430
        %v435 = vmul.f32 %v425, %v434
        %v436 = vrcp.pop %v433
        %v437 = vmul.f32 %v427, %v436
        %v438 = vpack.c.bf16 %v437, %v435
        %v440 = vsel %vm368, %v438, 0
        %442 = vmatprep.subr.bf16.mxu0 0
        %443 = vmatpush1.bf16.msra.mxu0 %v364
        %444 = vmatprep.subr.bf16.mxu0 0
        %445 = vmatpush1.bf16.msra.mxu0 0
        %446 = vmatprep.subr.bf16.mxu0 0
        %447 = vmatpush1.bf16.msra.mxu0 0
        %448 = vmatprep.subr.bf16.mxu0 0
        %449 = vmatpush1.bf16.msra.mxu0 0
        %450 = vmatprep.subr.bf16.mxu0 0
        %451 = vmatpush1.bf16.msra.mxu0 0
        %452 = vmatprep.subr.bf16.mxu0 0
        %453 = vmatpush1.bf16.msra.mxu0 0
        %454 = vmatprep.subr.bf16.mxu0 0
        %455 = vmatpush1.bf16.msra.mxu0 0
        %456 = vmatprep.subr.bf16.mxu0 0
        %457 = vmatpush1.bf16.msra.mxu0 0
        %458 = vmatprep.subr.bf16.mxu0 0
        %459 = vmatpush1.bf16.msra.mxu0 0
        %460 = vmatprep.subr.bf16.mxu0 0
        %461 = vmatpush1.bf16.msra.mxu0 0
        %462 = vmatprep.subr.bf16.mxu0 0
        %463 = vmatpush1.bf16.msra.mxu0 0
        %464 = vmatprep.subr.bf16.mxu0 0
        %465 = vmatpush1.bf16.msra.mxu0 0
        %466 = vmatprep.subr.bf16.mxu0 0
        %467 = vmatpush1.bf16.msra.mxu0 0
        %468 = vmatprep.subr.bf16.mxu0 0
        %469 = vmatpush1.bf16.msra.mxu0 0
        %470 = vmatprep.subr.bf16.mxu0 0
        %471 = vmatpush1.bf16.msra.mxu0 0
        %472 = vmatprep.subr.bf16.mxu0 0
        %473 = vmatpush1.bf16.msra.mxu0 0
        %474 = vmatprep.mubr.bf16.mxu0 0
        %475 = vmatmul.mubr.bf16.gmra.mrb[0].mxu0 %v440
        %v476 = vpop.f32.mrb[0].mxu0
        %v477 = vadd.f32 0.0, %v476
        %v478 = vpop.f32.mrb[0].mxu0
        %v479 = vpop.f32.mrb[0].mxu0
        %v480 = vadd.f32 0.0, %v479
        %v481 = vpop.f32.mrb[0].mxu0
        %482 = vdwg.mxu0
        %483 = vrot.lane.b32.xlu0 %v363, 112
        %v484 = vpop.permute.xlu0 %483
        %485 = vrot.lane.b32.xlu0 %v363, 48
        %v486 = vpop.permute.xlu0 %485
        %v488 = vsel %vm368, %v484, 0
        %v491 = vsel %vm368, %v486, 0
        %493 = vmatprep.subr.bf16.mxu0 0
        %494 = vmatpush1.bf16.xpose.msra.mxu0 %v491
        %495 = vmatprep.subr.bf16.mxu0 0
        %496 = vmatpush1.bf16.xpose.msra.mxu0 0
        %497 = vmatprep.subr.bf16.mxu0 0
        %498 = vmatpush1.bf16.xpose.msra.mxu0 0
        %499 = vmatprep.subr.bf16.mxu0 0
        %500 = vmatpush1.bf16.xpose.msra.mxu0 0
        %501 = vmatprep.subr.bf16.mxu0 0
        %502 = vmatpush1.bf16.xpose.msra.mxu0 0
        %503 = vmatprep.subr.bf16.mxu0 0
        %504 = vmatpush1.bf16.xpose.msra.mxu0 0
        %505 = vmatprep.subr.bf16.mxu0 0
        %506 = vmatpush1.bf16.xpose.msra.mxu0 0
        %507 = vmatprep.subr.bf16.mxu0 0
        %508 = vmatpush1.bf16.xpose.msra.mxu0 0
        %509 = vmatprep.subr.bf16.mxu0 0
        %510 = vmatpush1.bf16.xpose.msra.mxu0 0
        %511 = vmatprep.subr.bf16.mxu0 0
        %512 = vmatpush1.bf16.xpose.msra.mxu0 0
        %513 = vmatprep.subr.bf16.mxu0 0
        %514 = vmatpush1.bf16.xpose.msra.mxu0 0
        %515 = vmatprep.subr.bf16.mxu0 0
        %516 = vmatpush1.bf16.xpose.msra.mxu0 0
        %517 = vmatprep.subr.bf16.mxu0 0
        %518 = vmatpush1.bf16.xpose.msra.mxu0 0
        %519 = vmatprep.subr.bf16.mxu0 0
        %520 = vmatpush1.bf16.xpose.msra.mxu0 0
        %521 = vmatprep.subr.bf16.mxu0 0
        %522 = vmatpush1.bf16.xpose.msra.mxu0 0
        %523 = vmatprep.subr.bf16.mxu0 0
        %524 = vmatpush1.bf16.xpose.msra.mxu0 0
        %525 = vmatprep.mubr.bf16.mxu0 0
        %526 = vmatmul.mubr.bf16.gmra.mrb[0].mxu0 %v488
        %v527 = vpop.f32.mrb[0].mxu0
        %v528 = vadd.f32 %v226, %v527
        %v529 = vpop.f32.mrb[0].mxu0
        %v530 = vpop.f32.mrb[0].mxu0
        %v531 = vadd.f32 %v227, %v530
        %v532 = vpop.f32.mrb[0].mxu0
        %533 = vdwg.mxu0
        %v534 = vsel %vm368, %v528, -inf
        %535 = vmax.xlane.f32.xlu0 %v534
        %v536 = vpop.xlane.xlu0 %535
        %v537 = vsel %vm368, %v531, -inf
        %538 = vmax.xlane.f32.xlu0 %v537
        %v539 = vpop.xlane.xlu0 %538
        %v540 = vsub.f32 %v528, %v536
        %v541 = vsub.f32 %v531, %v539
        %v542 = vmul.f32 %v540, 1.442695
        %v543 = vpow.pop %v542
        %v544 = vmul.f32 %v541, 1.442695
        %v545 = vpow.pop %v544
        %v546 = vsel %vm368, %v543, 0.0
        %547 = vadd.xlane.f32.xlu0 %v546
        %v548 = vpop.xlane.xlu0 %547
        %v549 = vsel %vm368, %v545, 0.0
        %550 = vadd.xlane.f32.xlu0 %v549
        %v551 = vpop.xlane.xlu0 %550
        %v552 = vrcp.pop %v548
        %v553 = vmul.f32 %v543, %v552
        %v554 = vrcp.pop %v551
        %v555 = vmul.f32 %v545, %v554
        %v556 = vpack.c.bf16 %v555, %v553
        %558 = vrot.lane.b32.xlu0 %v364, 112
        %v559 = vpop.permute.xlu0 %558
        %v562 = vsel %vm368, %v556, 0
        %564 = vmatprep.subr.bf16.mxu0 0
        %565 = vmatpush1.bf16.msra.mxu0 %v559
        %566 = vmatprep.subr.bf16.mxu0 0
        %567 = vmatpush1.bf16.msra.mxu0 0
        %568 = vmatprep.subr.bf16.mxu0 0
        %569 = vmatpush1.bf16.msra.mxu0 0
        %570 = vmatprep.subr.bf16.mxu0 0
        %571 = vmatpush1.bf16.msra.mxu0 0
        %572 = vmatprep.subr.bf16.mxu0 0
        %573 = vmatpush1.bf16.msra.mxu0 0
        %574 = vmatprep.subr.bf16.mxu0 0
        %575 = vmatpush1.bf16.msra.mxu0 0
        %576 = vmatprep.subr.bf16.mxu0 0
        %577 = vmatpush1.bf16.msra.mxu0 0
        %578 = vmatprep.subr.bf16.mxu0 0
        %579 = vmatpush1.bf16.msra.mxu0 0
        %580 = vmatprep.subr.bf16.mxu0 0
        %581 = vmatpush1.bf16.msra.mxu0 0
        %582 = vmatprep.subr.bf16.mxu0 0
        %583 = vmatpush1.bf16.msra.mxu0 0
        %584 = vmatprep.subr.bf16.mxu0 0
        %585 = vmatpush1.bf16.msra.mxu0 0
        %586 = vmatprep.subr.bf16.mxu0 0
        %587 = vmatpush1.bf16.msra.mxu0 0
        %588 = vmatprep.subr.bf16.mxu0 0
        %589 = vmatpush1.bf16.msra.mxu0 0
        %590 = vmatprep.subr.bf16.mxu0 0
        %591 = vmatpush1.bf16.msra.mxu0 0
        %592 = vmatprep.subr.bf16.mxu0 0
        %593 = vmatpush1.bf16.msra.mxu0 0
        %594 = vmatprep.subr.bf16.mxu0 0
        %595 = vmatpush1.bf16.msra.mxu0 0
        %596 = vmatprep.mubr.bf16.mxu0 0
        %597 = vmatmul.mubr.bf16.gmra.mrb[0].mxu0 %v562
        %v598 = vpop.f32.mrb[0].mxu0
        %v599 = vadd.f32 0.0, %v598
        %v600 = vpop.f32.mrb[0].mxu0
        %v601 = vpop.f32.mrb[0].mxu0
        %v602 = vadd.f32 0.0, %v601
        %v603 = vpop.f32.mrb[0].mxu0
        %604 = vdwg.mxu0
        %605 = vrot.lane.b32.xlu0 %v363, 96
        %v606 = vpop.permute.xlu0 %605
        %607 = vrot.lane.b32.xlu0 %v363, 32
        %v608 = vpop.permute.xlu0 %607
        %v610 = vsel %vm368, %v606, 0
        %v613 = vsel %vm368, %v608, 0
        %615 = vmatprep.subr.bf16.mxu0 0
        %616 = vmatpush1.bf16.xpose.msra.mxu0 %v613
        %617 = vmatprep.subr.bf16.mxu0 0
        %618 = vmatpush1.bf16.xpose.msra.mxu0 0
        %619 = vmatprep.subr.bf16.mxu0 0
        %620 = vmatpush1.bf16.xpose.msra.mxu0 0
        %621 = vmatprep.subr.bf16.mxu0 0
        %622 = vmatpush1.bf16.xpose.msra.mxu0 0
        %623 = vmatprep.subr.bf16.mxu0 0
        %624 = vmatpush1.bf16.xpose.msra.mxu0 0
        %625 = vmatprep.subr.bf16.mxu0 0
        %626 = vmatpush1.bf16.xpose.msra.mxu0 0
        %627 = vmatprep.subr.bf16.mxu0 0
        %628 = vmatpush1.bf16.xpose.msra.mxu0 0
        %629 = vmatprep.subr.bf16.mxu0 0
        %630 = vmatpush1.bf16.xpose.msra.mxu0 0
        %631 = vmatprep.subr.bf16.mxu0 0
        %632 = vmatpush1.bf16.xpose.msra.mxu0 0
        %633 = vmatprep.subr.bf16.mxu0 0
        %634 = vmatpush1.bf16.xpose.msra.mxu0 0
        %635 = vmatprep.subr.bf16.mxu0 0
        %636 = vmatpush1.bf16.xpose.msra.mxu0 0
        %637 = vmatprep.subr.bf16.mxu0 0
        %638 = vmatpush1.bf16.xpose.msra.mxu0 0
        %639 = vmatprep.subr.bf16.mxu0 0
        %640 = vmatpush1.bf16.xpose.msra.mxu0 0
        %641 = vmatprep.subr.bf16.mxu0 0
        %642 = vmatpush1.bf16.xpose.msra.mxu0 0
        %643 = vmatprep.subr.bf16.mxu0 0
        %644 = vmatpush1.bf16.xpose.msra.mxu0 0
        %645 = vmatprep.subr.bf16.mxu0 0
        %646 = vmatpush1.bf16.xpose.msra.mxu0 0
        %647 = vmatprep.mubr.bf16.mxu0 0
        %648 = vmatmul.mubr.bf16.gmra.mrb[0].mxu0 %v610
        %v649 = vpop.f32.mrb[0].mxu0
        %v650 = vadd.f32 %v226, %v649
        %v651 = vpop.f32.mrb[0].mxu0
        %v652 = vpop.f32.mrb[0].mxu0
        %v653 = vadd.f32 %v227, %v652
        %v654 = vpop.f32.mrb[0].mxu0
        %655 = vdwg.mxu0
        %v656 = vsel %vm368, %v650, -inf
        %657 = vmax.xlane.f32.xlu0 %v656
        %v658 = vpop.xlane.xlu0 %657
        %v659 = vsel %vm368, %v653, -inf
        %660 = vmax.xlane.f32.xlu0 %v659
        %v661 = vpop.xlane.xlu0 %660
        %v662 = vsub.f32 %v650, %v658
        %v663 = vsub.f32 %v653, %v661
        %v664 = vmul.f32 %v662, 1.442695
        %v665 = vpow.pop %v664
        %v666 = vmul.f32 %v663, 1.442695
        %v667 = vpow.pop %v666
        %v668 = vsel %vm368, %v665, 0.0
        %669 = vadd.xlane.f32.xlu0 %v668
        %v670 = vpop.xlane.xlu0 %669
        %v671 = vsel %vm368, %v667, 0.0
        %672 = vadd.xlane.f32.xlu0 %v671
        %v673 = vpop.xlane.xlu0 %672
        %v674 = vrcp.pop %v670
        %v675 = vmul.f32 %v665, %v674
        %v676 = vrcp.pop %v673
        %v677 = vmul.f32 %v667, %v676
        %v678 = vpack.c.bf16 %v677, %v675
        %679 = vrot.lane.b32.xlu0 %v364, 96
        %v680 = vpop.permute.xlu0 %679
        %v683 = vsel %vm368, %v678, 0
        %685 = vmatprep.subr.bf16.mxu0 0
        %686 = vmatpush1.bf16.msra.mxu0 %v680
        %687 = vmatprep.subr.bf16.mxu0 0
        %688 = vmatpush1.bf16.msra.mxu0 0
        %689 = vmatprep.subr.bf16.mxu0 0
        %690 = vmatpush1.bf16.msra.mxu0 0
        %691 = vmatprep.subr.bf16.mxu0 0
        %692 = vmatpush1.bf16.msra.mxu0 0
        %693 = vmatprep.subr.bf16.mxu0 0
        %694 = vmatpush1.bf16.msra.mxu0 0
        %695 = vmatprep.subr.bf16.mxu0 0
        %696 = vmatpush1.bf16.msra.mxu0 0
        %697 = vmatprep.subr.bf16.mxu0 0
        %698 = vmatpush1.bf16.msra.mxu0 0
        %699 = vmatprep.subr.bf16.mxu0 0
        %700 = vmatpush1.bf16.msra.mxu0 0
        %701 = vmatprep.subr.bf16.mxu0 0
        %702 = vmatpush1.bf16.msra.mxu0 0
        %703 = vmatprep.subr.bf16.mxu0 0
        %704 = vmatpush1.bf16.msra.mxu0 0
        %705 = vmatprep.subr.bf16.mxu0 0
        %706 = vmatpush1.bf16.msra.mxu0 0
        %707 = vmatprep.subr.bf16.mxu0 0
        %708 = vmatpush1.bf16.msra.mxu0 0
        %709 = vmatprep.subr.bf16.mxu0 0
        %710 = vmatpush1.bf16.msra.mxu0 0
        %711 = vmatprep.subr.bf16.mxu0 0
        %712 = vmatpush1.bf16.msra.mxu0 0
        %713 = vmatprep.subr.bf16.mxu0 0
        %714 = vmatpush1.bf16.msra.mxu0 0
        %715 = vmatprep.subr.bf16.mxu0 0
        %716 = vmatpush1.bf16.msra.mxu0 0
        %717 = vmatprep.mubr.bf16.mxu0 0
        %718 = vmatmul.mubr.bf16.gmra.mrb[0].mxu0 %v683
        %v719 = vpop.f32.mrb[0].mxu0
        %v720 = vadd.f32 0.0, %v719
        %v721 = vpop.f32.mrb[0].mxu0
        %v722 = vpop.f32.mrb[0].mxu0
        %v723 = vadd.f32 0.0, %v722
        %v724 = vpop.f32.mrb[0].mxu0
        %725 = vdwg.mxu0
        %726 = vrot.lane.b32.xlu0 %v363, 80
        %v727 = vpop.permute.xlu0 %726
        %728 = vrot.lane.b32.xlu0 %v363, 16
        %v729 = vpop.permute.xlu0 %728
        %v731 = vsel %vm368, %v727, 0
        %v734 = vsel %vm368, %v729, 0
        %736 = vmatprep.subr.bf16.mxu0 0
        %737 = vmatpush1.bf16.xpose.msra.mxu0 %v734
        %738 = vmatprep.subr.bf16.mxu0 0
        %739 = vmatpush1.bf16.xpose.msra.mxu0 0
        %740 = vmatprep.subr.bf16.mxu0 0
        %741 = vmatpush1.bf16.xpose.msra.mxu0 0
        %742 = vmatprep.subr.bf16.mxu0 0
        %743 = vmatpush1.bf16.xpose.msra.mxu0 0
        %744 = vmatprep.subr.bf16.mxu0 0
        %745 = vmatpush1.bf16.xpose.msra.mxu0 0
        %746 = vmatprep.subr.bf16.mxu0 0
        %747 = vmatpush1.bf16.xpose.msra.mxu0 0
        %748 = vmatprep.subr.bf16.mxu0 0
        %749 = vmatpush1.bf16.xpose.msra.mxu0 0
        %750 = vmatprep.subr.bf16.mxu0 0
        %751 = vmatpush1.bf16.xpose.msra.mxu0 0
        %752 = vmatprep.subr.bf16.mxu0 0
        %753 = vmatpush1.bf16.xpose.msra.mxu0 0
        %754 = vmatprep.subr.bf16.mxu0 0
        %755 = vmatpush1.bf16.xpose.msra.mxu0 0
        %756 = vmatprep.subr.bf16.mxu0 0
        %757 = vmatpush1.bf16.xpose.msra.mxu0 0
        %758 = vmatprep.subr.bf16.mxu0 0
        %759 = vmatpush1.bf16.xpose.msra.mxu0 0
        %760 = vmatprep.subr.bf16.mxu0 0
        %761 = vmatpush1.bf16.xpose.msra.mxu0 0
        %762 = vmatprep.subr.bf16.mxu0 0
        %763 = vmatpush1.bf16.xpose.msra.mxu0 0
        %764 = vmatprep.subr.bf16.mxu0 0
        %765 = vmatpush1.bf16.xpose.msra.mxu0 0
        %766 = vmatprep.subr.bf16.mxu0 0
        %767 = vmatpush1.bf16.xpose.msra.mxu0 0
        %768 = vmatprep.mubr.bf16.mxu0 0
        %769 = vmatmul.mubr.bf16.gmra.mrb[0].mxu0 %v731
        %v770 = vpop.f32.mrb[0].mxu0
        %v771 = vadd.f32 %v226, %v770
        %v772 = vpop.f32.mrb[0].mxu0
        %v773 = vpop.f32.mrb[0].mxu0
        %v774 = vadd.f32 %v227, %v773
        %v775 = vpop.f32.mrb[0].mxu0
        %776 = vdwg.mxu0
        %v777 = vsel %vm368, %v771, -inf
        %778 = vmax.xlane.f32.xlu0 %v777
        %v779 = vpop.xlane.xlu0 %778
        %v780 = vsel %vm368, %v774, -inf
        %781 = vmax.xlane.f32.xlu0 %v780
        %v782 = vpop.xlane.xlu0 %781
        %v783 = vsub.f32 %v771, %v779
        %v784 = vsub.f32 %v774, %v782
        %v785 = vmul.f32 %v783, 1.442695
        %v786 = vpow.pop %v785
        %v787 = vmul.f32 %v784, 1.442695
        %v788 = vpow.pop %v787
        %v789 = vsel %vm368, %v786, 0.0
        %790 = vadd.xlane.f32.xlu0 %v789
        %v791 = vpop.xlane.xlu0 %790
        %v792 = vsel %vm368, %v788, 0.0
        %793 = vadd.xlane.f32.xlu0 %v792
        %v794 = vpop.xlane.xlu0 %793
        %v795 = vrcp.pop %v791
        %v796 = vmul.f32 %v786, %v795
        %v797 = vrcp.pop %v794
        %v798 = vmul.f32 %v788, %v797
        %v799 = vpack.c.bf16 %v798, %v796
        %800 = vrot.lane.b32.xlu0 %v364, 80
        %v801 = vpop.permute.xlu0 %800
        %v804 = vsel %vm368, %v799, 0
        %806 = vmatprep.subr.bf16.mxu0 0
        %807 = vmatpush1.bf16.msra.mxu0 %v801
        %808 = vmatprep.subr.bf16.mxu0 0
        %809 = vmatpush1.bf16.msra.mxu0 0
        %810 = vmatprep.subr.bf16.mxu0 0
        %811 = vmatpush1.bf16.msra.mxu0 0
        %812 = vmatprep.subr.bf16.mxu0 0
        %813 = vmatpush1.bf16.msra.mxu0 0
        %814 = vmatprep.subr.bf16.mxu0 0
        %815 = vmatpush1.bf16.msra.mxu0 0
        %816 = vmatprep.subr.bf16.mxu0 0
        %817 = vmatpush1.bf16.msra.mxu0 0
        %818 = vmatprep.subr.bf16.mxu0 0
        %819 = vmatpush1.bf16.msra.mxu0 0
        %820 = vmatprep.subr.bf16.mxu0 0
        %821 = vmatpush1.bf16.msra.mxu0 0
        %822 = vmatprep.subr.bf16.mxu0 0
        %823 = vmatpush1.bf16.msra.mxu0 0
        %824 = vmatprep.subr.bf16.mxu0 0
        %825 = vmatpush1.bf16.msra.mxu0 0
        %826 = vmatprep.subr.bf16.mxu0 0
        %827 = vmatpush1.bf16.msra.mxu0 0
        %828 = vmatprep.subr.bf16.mxu0 0
        %829 = vmatpush1.bf16.msra.mxu0 0
        %830 = vmatprep.subr.bf16.mxu0 0
        %831 = vmatpush1.bf16.msra.mxu0 0
        %832 = vmatprep.subr.bf16.mxu0 0
        %833 = vmatpush1.bf16.msra.mxu0 0
        %834 = vmatprep.subr.bf16.mxu0 0
        %835 = vmatpush1.bf16.msra.mxu0 0
        %836 = vmatprep.subr.bf16.mxu0 0
        %837 = vmatpush1.bf16.msra.mxu0 0
        %838 = vmatprep.mubr.bf16.mxu0 0
        %839 = vmatmul.mubr.bf16.gmra.mrb[0].mxu0 %v804
        %v840 = vpop.f32.mrb[0].mxu0
        %v841 = vadd.f32 0.0, %v840
        %v842 = vpop.f32.mrb[0].mxu0
        %v843 = vpop.f32.mrb[0].mxu0
        %v844 = vadd.f32 0.0, %v843
        %v845 = vpop.f32.mrb[0].mxu0
        %846 = vdwg.mxu0
        %849 = vrot.lane.b32.xlu0 %v599, 16
        %v850 = vpop.permute.xlu0 %849
        %851 = vrot.lane.b32.xlu0 %v602, 16
        %v852 = vpop.permute.xlu0 %851
        %857 = vrot.lane.b32.xlu0 %v720, 32
        %v858 = vpop.permute.xlu0 %857
        %859 = vrot.lane.b32.xlu0 %v723, 32
        %v860 = vpop.permute.xlu0 %859
        %865 = vrot.lane.b32.xlu0 %v841, 48
        %v866 = vpop.permute.xlu0 %865
        %867 = vrot.lane.b32.xlu0 %v844, 48
        %v868 = vpop.permute.xlu0 %867
        %v871 = vsel %vm368, %v477, %v850
        %v872 = vsel %vm368, %v480, %v852
        %vm873 = vcmask 261120
        %v874 = vsel %vm873, %v871, %v858
        %v875 = vsel %vm873, %v872, %v860
        %vm876 = vcmask 392192
        %v877 = vsel %vm876, %v874, %v866
        %v878 = vsel %vm876, %v875, %v868
        %v879 = vpack.c.bf16 %v878, %v877
        %v880 = vld [vmem:[%s1 + $0x4] sm:$0xf]
        %v881 = vld [vmem:[%s1 + $0x14] sm:$0xf]
        %v882 = vld [vmem:[%s1 + $0x24] sm:$0xf]
        %v883 = vld [vmem:[%s1 + $0x34] sm:$0xf]
        %v884 = vld [vmem:[%s1 + $0x44] sm:$0xf]
        %v885 = vld [vmem:[%s1 + $0x54] sm:$0xf]
        %v886 = vld [vmem:[%s1 + $0x64] sm:$0xf]
        %v887 = vld [vmem:[%s1 + $0x74] sm:$0xf]
        %v896 = vunpack.c.l.b16 %v880
        %v897 = vunpack.c.l.b16 %v881
        %v898 = vunpack.c.l.b16 %v882
        %v899 = vunpack.c.l.b16 %v883
        %v900 = vunpack.c.l.b16 %v884
        %v901 = vunpack.c.l.b16 %v885
        %v902 = vunpack.c.l.b16 %v886
        %v903 = vunpack.c.l.b16 %v887
        %v904 = vpack.c.b16 %v897, %v896
        %v905 = vpack.c.b16 %v899, %v898
        %v906 = vpack.c.b16 %v901, %v900
        %v907 = vpack.c.b16 %v903, %v902
        %908 = vrot.lane.b32.xlu0 %v904, 64
        %v909 = vpop.permute.xlu0 %908
        %910 = vrot.lane.b32.xlu0 %v905, 64
        %v911 = vpop.permute.xlu0 %910
        %912 = vrot.lane.b32.xlu0 %v906, 64
        %v913 = vpop.permute.xlu0 %912
        %914 = vrot.lane.b32.xlu0 %v907, 64
        %v915 = vpop.permute.xlu0 %914
        %v921 = vsel %vm228, %v879, 0
        %923 = vmatprep.subr.bf16.mxu0 0
        %924 = vmatpush1.bf16.msra.mxu0 %v909
        %925 = vmatprep.subr.bf16.mxu0 0
        %926 = vmatpush1.bf16.msra.mxu0 %v911
        %927 = vmatprep.subr.bf16.mxu0 0
        %928 = vmatpush1.bf16.msra.mxu0 %v913
        %929 = vmatprep.subr.bf16.mxu0 0
        %930 = vmatpush1.bf16.msra.mxu0 %v915
        %931 = vmatprep.subr.bf16.mxu0 0
        %932 = vmatpush1.bf16.msra.mxu0 0
        %933 = vmatprep.subr.bf16.mxu0 0
        %934 = vmatpush1.bf16.msra.mxu0 0
        %935 = vmatprep.subr.bf16.mxu0 0
        %936 = vmatpush1.bf16.msra.mxu0 0
        %937 = vmatprep.subr.bf16.mxu0 0
        %938 = vmatpush1.bf16.msra.mxu0 0
        %939 = vmatprep.subr.bf16.mxu0 0
        %940 = vmatpush1.bf16.msra.mxu0 0
        %941 = vmatprep.subr.bf16.mxu0 0
        %942 = vmatpush1.bf16.msra.mxu0 0
        %943 = vmatprep.subr.bf16.mxu0 0
        %944 = vmatpush1.bf16.msra.mxu0 0
        %945 = vmatprep.subr.bf16.mxu0 0
        %946 = vmatpush1.bf16.msra.mxu0 0
        %947 = vmatprep.subr.bf16.mxu0 0
        %948 = vmatpush1.bf16.msra.mxu0 0
        %949 = vmatprep.subr.bf16.mxu0 0
        %950 = vmatpush1.bf16.msra.mxu0 0
        %951 = vmatprep.subr.bf16.mxu0 0
        %952 = vmatpush1.bf16.msra.mxu0 0
        %953 = vmatprep.subr.bf16.mxu0 0
        %954 = vmatpush1.bf16.msra.mxu0 0
        %955 = vmatprep.mubr.bf16.mxu0 0
        %956 = vmatmul.mubr.bf16.gmra.mrb[0].mxu0 %v921
        %v957 = vpop.f32.mrb[0].mxu0
        %v958 = vadd.f32 0.0, %v957
        %v959 = vpop.f32.mrb[0].mxu0
        %v960 = vpop.f32.mrb[0].mxu0
        %v961 = vadd.f32 0.0, %v960
        %v962 = vpop.f32.mrb[0].mxu0
        %963 = vdwg.mxu0
        %v964 = vadd.f32 %v224, %v958
        %v965 = vadd.f32 %v225, %v961
        %v966 = vld [vmem:[%s3 + $0x1] sm:$0x1]
        %v968 = vlaneseq
        %v969 = vshrl.u32 %v968, 7
        %v970 = vsub.s32 0, %v969
        %v971 = vrot.slane %v966, %v970
        %972 = vrot.lane.b32.xlu0 %v971, 64
        %v973 = vpop.permute.xlu0 %972
        %v975 = vadd.f32 %v964, %v973
        %v976 = vadd.f32 %v965, %v973
        %v977 = vsel %vm228, %v975, 0.0
        %978 = vadd.xlane.f32.xlu0 %v977
        %v979 = vpop.xlane.xlu0 %978
        %v980 = vsel %vm228, %v976, 0.0
        %981 = vadd.xlane.f32.xlu0 %v980
        %v982 = vpop.xlane.xlu0 %981
        %v983 = vmul.f32 %v979, %v235
        %v984 = vmul.f32 %v982, %v235
        %v985 = vsub.f32 %v975, %v983
        %v986 = vsub.f32 %v976, %v984
        %v987 = vmul.f32 %v985, %v985
        %v988 = vmul.f32 %v986, %v986
        %v989 = vsel %vm228, %v987, 0.0
        %990 = vadd.xlane.f32.xlu0 %v989
        %v991 = vpop.xlane.xlu0 %990
        %v992 = vsel %vm228, %v988, 0.0
        %993 = vadd.xlane.f32.xlu0 %v992
        %v994 = vpop.xlane.xlu0 %993
        %v995 = vmul.f32 %v991, %v235
        %v996 = vmul.f32 %v994, %v235
        %v997 = vadd.f32 %v995, 1e-05
        %v998 = vadd.f32 %v996, 1e-05
        %v999 = vrsqrt.pop %v997
        %v1000 = vrsqrt.pop %v998
        %v1001 = vmul.f32 %v985, %v999
        %v1002 = vmul.f32 %v986, %v1000
        %v1003 = vpack.c.bf16 %v1002, %v1001
        %v1004 = vld [vmem:[%s1 + $0x8] sm:$0xff]
        %v1005 = vld [vmem:[%s1 + $0x18] sm:$0xff]
        %v1006 = vld [vmem:[%s1 + $0x28] sm:$0xff]
        %v1007 = vld [vmem:[%s1 + $0x38] sm:$0xff]
        %v1008 = vld [vmem:[%s1 + $0x48] sm:$0xff]
        %v1009 = vld [vmem:[%s1 + $0x58] sm:$0xff]
        %v1010 = vld [vmem:[%s1 + $0x68] sm:$0xff]
        %v1011 = vld [vmem:[%s1 + $0x78] sm:$0xff]
        %v1012 = vld [vmem:[%s3 + $0x2] sm:$0x3]
        %v1014 = vlaneseq
        %v1015 = vshrl.u32 %v1014, 7
        %v1016 = vsub.s32 0, %v1015
        %v1017 = vrot.slane %v1012, %v1016
        %v1018 = vlaneseq
        %v1019 = vshrl.u32 %v1018, 7
        %v1020 = vsub.s32 1, %v1019
        %v1021 = vrot.slane %v1012, %v1020
        %v1032 = vunpack.c.l.b16 %v1004
        %v1033 = vunpack.c.h.b16 %v1004
        %v1034 = vunpack.c.l.b16 %v1005
        %v1035 = vunpack.c.h.b16 %v1005
        %v1036 = vunpack.c.l.b16 %v1006
        %v1037 = vunpack.c.h.b16 %v1006
        %v1038 = vunpack.c.l.b16 %v1007
        %v1039 = vunpack.c.h.b16 %v1007
        %v1040 = vunpack.c.l.b16 %v1008
        %v1041 = vunpack.c.h.b16 %v1008
        %v1042 = vunpack.c.l.b16 %v1009
        %v1043 = vunpack.c.h.b16 %v1009
        %v1044 = vunpack.c.l.b16 %v1010
        %v1045 = vunpack.c.h.b16 %v1010
        %v1046 = vunpack.c.l.b16 %v1011
        %v1047 = vunpack.c.h.b16 %v1011
        %v1048 = vpack.c.b16 %v1034, %v1032
        %v1049 = vpack.c.b16 %v1035, %v1033
        %v1050 = vpack.c.b16 %v1038, %v1036
        %v1051 = vpack.c.b16 %v1039, %v1037
        %v1052 = vpack.c.b16 %v1042, %v1040
        %v1053 = vpack.c.b16 %v1043, %v1041
        %v1054 = vpack.c.b16 %v1046, %v1044
        %v1055 = vpack.c.b16 %v1047, %v1045
        %v1065 = vsel %vm228, %v1003, 0
        %1067 = vmatprep.subr.bf16.mxu0 %v1049
        %1068 = vmatpush1.bf16.msra.mxu0 %v1048
        %1069 = vmatprep.subr.bf16.mxu0 %v1051
        %1070 = vmatpush1.bf16.msra.mxu0 %v1050
        %1071 = vmatprep.subr.bf16.mxu0 %v1053
        %1072 = vmatpush1.bf16.msra.mxu0 %v1052
        %1073 = vmatprep.subr.bf16.mxu0 %v1055
        %1074 = vmatpush1.bf16.msra.mxu0 %v1054
        %1075 = vmatprep.subr.bf16.mxu0 0
        %1076 = vmatpush1.bf16.msra.mxu0 0
        %1077 = vmatprep.subr.bf16.mxu0 0
        %1078 = vmatpush1.bf16.msra.mxu0 0
        %1079 = vmatprep.subr.bf16.mxu0 0
        %1080 = vmatpush1.bf16.msra.mxu0 0
        %1081 = vmatprep.subr.bf16.mxu0 0
        %1082 = vmatpush1.bf16.msra.mxu0 0
        %1083 = vmatprep.subr.bf16.mxu0 0
        %1084 = vmatpush1.bf16.msra.mxu0 0
        %1085 = vmatprep.subr.bf16.mxu0 0
        %1086 = vmatpush1.bf16.msra.mxu0 0
        %1087 = vmatprep.subr.bf16.mxu0 0
        %1088 = vmatpush1.bf16.msra.mxu0 0
        %1089 = vmatprep.subr.bf16.mxu0 0
        %1090 = vmatpush1.bf16.msra.mxu0 0
        %1091 = vmatprep.subr.bf16.mxu0 0
        %1092 = vmatpush1.bf16.msra.mxu0 0
        %1093 = vmatprep.subr.bf16.mxu0 0
        %1094 = vmatpush1.bf16.msra.mxu0 0
        %1095 = vmatprep.subr.bf16.mxu0 0
        %1096 = vmatpush1.bf16.msra.mxu0 0
        %1097 = vmatprep.subr.bf16.mxu0 0
        %1098 = vmatpush1.bf16.msra.mxu0 0
        %1099 = vmatprep.mubr.bf16.mxu0 0
        %1100 = vmatmul.mubr.bf16.gmra.mrb[0].mxu0 %v1065
        %v1101 = vpop.f32.mrb[0].mxu0
        %v1102 = vadd.f32 %v1017, %v1101
        %v1103 = vpop.f32.mrb[0].mxu0
        %v1104 = vadd.f32 %v1021, %v1103
        %v1105 = vpop.f32.mrb[0].mxu0
        %v1106 = vadd.f32 %v1017, %v1105
        %v1107 = vpop.f32.mrb[0].mxu0
        %v1108 = vadd.f32 %v1021, %v1107
        %1109 = vdwg.mxu0
        %v1110 = vmax.f32 %v1102, 0.0
        %v1111 = vmax.f32 %v1104, 0.0
        %v1112 = vmax.f32 %v1106, 0.0
        %v1113 = vmax.f32 %v1108, 0.0
        %v1114 = vpack.c.bf16 %v1112, %v1110
        %v1115 = vpack.c.bf16 %v1113, %v1111
        %v1116 = vld [vmem:[%s2] sm:$0xf]
        %v1117 = vld [vmem:[%s2 + $0x4] sm:$0xf]
        %v1118 = vld [vmem:[%s2 + $0x8] sm:$0xf]
        %v1119 = vld [vmem:[%s2 + $0xc] sm:$0xf]
        %v1120 = vld [vmem:[%s2 + $0x10] sm:$0xf]
        %v1121 = vld [vmem:[%s2 + $0x14] sm:$0xf]
        %v1122 = vld [vmem:[%s2 + $0x18] sm:$0xf]
        %v1123 = vld [vmem:[%s2 + $0x1c] sm:$0xf]
        %v1124 = vld [vmem:[%s2 + $0x20] sm:$0xf]
        %v1125 = vld [vmem:[%s2 + $0x24] sm:$0xf]
        %v1126 = vld [vmem:[%s2 + $0x28] sm:$0xf]
        %v1127 = vld [vmem:[%s2 + $0x2c] sm:$0xf]
        %v1128 = vld [vmem:[%s2 + $0x30] sm:$0xf]
        %v1129 = vld [vmem:[%s2 + $0x34] sm:$0xf]
        %v1130 = vld [vmem:[%s2 + $0x38] sm:$0xf]
        %v1131 = vld [vmem:[%s2 + $0x3c] sm:$0xf]
        %v1132 = vld [vmem:[%s2 + $0x40] sm:$0xf]
        %v1133 = vld [vmem:[%s2 + $0x44] sm:$0xf]
        %v1134 = vld [vmem:[%s2 + $0x48] sm:$0xf]
        %v1135 = vld [vmem:[%s2 + $0x4c] sm:$0xf]
        %v1136 = vld [vmem:[%s2 + $0x50] sm:$0xf]
        %v1137 = vld [vmem:[%s2 + $0x54] sm:$0xf]
        %v1138 = vld [vmem:[%s2 + $0x58] sm:$0xf]
        %v1139 = vld [vmem:[%s2 + $0x5c] sm:$0xf]
        %v1140 = vld [vmem:[%s2 + $0x60] sm:$0xf]
        %v1141 = vld [vmem:[%s2 + $0x64] sm:$0xf]
        %v1142 = vld [vmem:[%s2 + $0x68] sm:$0xf]
        %v1143 = vld [vmem:[%s2 + $0x6c] sm:$0xf]
        %v1144 = vld [vmem:[%s2 + $0x70] sm:$0xf]
        %v1145 = vld [vmem:[%s2 + $0x74] sm:$0xf]
        %v1146 = vld [vmem:[%s2 + $0x78] sm:$0xf]
        %v1147 = vld [vmem:[%s2 + $0x7c] sm:$0xf]
        %v1148 = vld [vmem:[%s3 + $0x4] sm:$0x1]
        %v1150 = vlaneseq
        %v1151 = vshrl.u32 %v1150, 7
        %v1152 = vsub.s32 0, %v1151
        %v1153 = vrot.slane %v1148, %v1152
        %v1187 = vunpack.c.l.b16 %v1116
        %v1188 = vunpack.c.l.b16 %v1117
        %v1189 = vunpack.c.l.b16 %v1118
        %v1190 = vunpack.c.l.b16 %v1119
        %v1191 = vunpack.c.l.b16 %v1120
        %v1192 = vunpack.c.l.b16 %v1121
        %v1193 = vunpack.c.l.b16 %v1122
        %v1194 = vunpack.c.l.b16 %v1123
        %v1195 = vunpack.c.l.b16 %v1124
        %v1196 = vunpack.c.l.b16 %v1125
        %v1197 = vunpack.c.l.b16 %v1126
        %v1198 = vunpack.c.l.b16 %v1127
        %v1199 = vunpack.c.l.b16 %v1128
        %v1200 = vunpack.c.l.b16 %v1129
        %v1201 = vunpack.c.l.b16 %v1130
        %v1202 = vunpack.c.l.b16 %v1131
        %v1203 = vunpack.c.l.b16 %v1132
        %v1204 = vunpack.c.l.b16 %v1133
        %v1205 = vunpack.c.l.b16 %v1134
        %v1206 = vunpack.c.l.b16 %v1135
        %v1207 = vunpack.c.l.b16 %v1136
        %v1208 = vunpack.c.l.b16 %v1137
        %v1209 = vunpack.c.l.b16 %v1138
        %v1210 = vunpack.c.l.b16 %v1139
        %v1211 = vunpack.c.l.b16 %v1140
        %v1212 = vunpack.c.l.b16 %v1141
        %v1213 = vunpack.c.l.b16 %v1142
        %v1214 = vunpack.c.l.b16 %v1143
        %v1215 = vunpack.c.l.b16 %v1144
        %v1216 = vunpack.c.l.b16 %v1145
        %v1217 = vunpack.c.l.b16 %v1146
        %v1218 = vunpack.c.l.b16 %v1147
        %v1219 = vpack.c.b16 %v1188, %v1187
        %v1220 = vpack.c.b16 %v1190, %v1189
        %v1221 = vpack.c.b16 %v1192, %v1191
        %v1222 = vpack.c.b16 %v1194, %v1193
        %v1223 = vpack.c.b16 %v1196, %v1195
        %v1224 = vpack.c.b16 %v1198, %v1197
        %v1225 = vpack.c.b16 %v1200, %v1199
        %v1226 = vpack.c.b16 %v1202, %v1201
        %v1227 = vpack.c.b16 %v1204, %v1203
        %v1228 = vpack.c.b16 %v1206, %v1205
        %v1229 = vpack.c.b16 %v1208, %v1207
        %v1230 = vpack.c.b16 %v1210, %v1209
        %v1231 = vpack.c.b16 %v1212, %v1211
        %v1232 = vpack.c.b16 %v1214, %v1213
        %v1233 = vpack.c.b16 %v1216, %v1215
        %v1234 = vpack.c.b16 %v1218, %v1217
        %1251 = vmatprep.subr.bf16.mxu0 0
        %1252 = vmatpush1.bf16.msra.mxu0 %v1219
        %1253 = vmatprep.subr.bf16.mxu0 0
        %1254 = vmatpush1.bf16.msra.mxu0 %v1220
        %1255 = vmatprep.subr.bf16.mxu0 0
        %1256 = vmatpush1.bf16.msra.mxu0 %v1221
        %1257 = vmatprep.subr.bf16.mxu0 0
        %1258 = vmatpush1.bf16.msra.mxu0 %v1222
        %1259 = vmatprep.subr.bf16.mxu0 0
        %1260 = vmatpush1.bf16.msra.mxu0 %v1223
        %1261 = vmatprep.subr.bf16.mxu0 0
        %1262 = vmatpush1.bf16.msra.mxu0 %v1224
        %1263 = vmatprep.subr.bf16.mxu0 0
        %1264 = vmatpush1.bf16.msra.mxu0 %v1225
        %1265 = vmatprep.subr.bf16.mxu0 0
        %1266 = vmatpush1.bf16.msra.mxu0 %v1226
        %1267 = vmatprep.subr.bf16.mxu0 0
        %1268 = vmatpush1.bf16.msra.mxu0 %v1227
        %1269 = vmatprep.subr.bf16.mxu0 0
        %1270 = vmatpush1.bf16.msra.mxu0 %v1228
        %1271 = vmatprep.subr.bf16.mxu0 0
        %1272 = vmatpush1.bf16.msra.mxu0 %v1229
        %1273 = vmatprep.subr.bf16.mxu0 0
        %1274 = vmatpush1.bf16.msra.mxu0 %v1230
        %1275 = vmatprep.subr.bf16.mxu0 0
        %1276 = vmatpush1.bf16.msra.mxu0 %v1231
        %1277 = vmatprep.subr.bf16.mxu0 0
        %1278 = vmatpush1.bf16.msra.mxu0 %v1232
        %1279 = vmatprep.subr.bf16.mxu0 0
        %1280 = vmatpush1.bf16.msra.mxu0 %v1233
        %1281 = vmatprep.subr.bf16.mxu0 0
        %1282 = vmatpush1.bf16.msra.mxu0 %v1234
        %1283 = vmatprep.mubr.bf16.mxu0 %v1115
        %1284 = vmatmul.mubr.bf16.gmra.mrb[0].mxu0 %v1114
        %v1285 = vpop.f32.mrb[0].mxu0
        %v1286 = vadd.f32 %v1153, %v1285
        %v1287 = vpop.f32.mrb[0].mxu0
        %v1288 = vpop.f32.mrb[0].mxu0
        %v1289 = vadd.f32 %v1153, %v1288
        %v1290 = vpop.f32.mrb[0].mxu0
        %1291 = vdwg.mxu0
        %v1292 = vadd.f32 %v975, %v1286
        %v1293 = vadd.f32 %v976, %v1289
        %1294 = vst.msk [vmem:[%s217] sm:$0xff] %vm228, %v1292
        %1295 = vst.msk [vmem:[%s217 + $0x8] sm:$0xff] %vm228, %v1293
        %s1296 = sand.u32 %s137, 1
        %s1297 = scalar_lea.sflag [#allocation3], %s1296
        %s1298 = sand.u32 %s137, 1
        %s1299 = smul.addr %s1298, 16
        %s1300 = scalar_lea.vmem [#allocation2], %s1299
        // Predicated region
        $region41: #{tpu_custom_call.1} parent=39 // pred_check
          %p1301 = pneg %p147
        $region42: #{tpu_custom_call.1} parent=39 // pred_check_branch
          %1303 = sbr.rel (%p1301) target = $region44
        $region43: #{tpu_custom_call.1} parent=39 // pred_region
          %s1305 = ssub.s32 256, 256
          %1306 = vsyncadd %s1297, %s1305
          %s1307 = smul.addr %s19, 2
          %s1308 = smul.addr %s1307, 128
          %s1309 = scalar_lea.hbm %s5, %s1308
          %s1310 = sshll.u32 %s1300, 4
          %s1311 = int_to_ptr.vmem [resolvable:$true] %s1310
          %1316 = dma.vmem_to_hbm [thread:$0]  %s1311, 256, %s1309, %s1297, 128, 128, 8
        $region44: #{tpu_custom_call.1} parent=39 // pred_fallthru
          _
      $region40: #{tpu_custom_call.1} parent=5 // pred_fallthru
        _
      %p1317 = scmp.le.s32.totalorder 2, %s14
      // Predicated region
      $region45: #{tpu_custom_call.1} parent=5 // pred_check
        %p1318 = pneg %p1317
      $region46: #{tpu_custom_call.1} parent=5 // pred_check_branch
        %1320 = sbr.rel (%p1318) target = $region48
      $region47: #{tpu_custom_call.1} parent=5 // pred_region
        %s1321 = ssub.s32 %s14, 2
        // Predicated region
        $region49: #{tpu_custom_call.1} parent=47 // pred_check
          %p1322 = pneg %p153
        $region50: #{tpu_custom_call.1} parent=47 // pred_check_branch
          %1324 = sbr.rel (%p1322) target = $region52
        $region51: #{tpu_custom_call.1} parent=47 // pred_region
          %s1325 = sand.u32 %s138, 1
          %s1326 = scalar_lea.sflag [#allocation3], %s1325
          %s1327 = sand.u32 %s138, 1
          %s1328 = smul.addr %s1327, 16
          %s1329 = scalar_lea.vmem [#allocation2], %s1328
          %1330 = dma.done %s1326, 256
        $region52: #{tpu_custom_call.1} parent=47 // pred_fallthru
          _
      $region48: #{tpu_custom_call.1} parent=5 // pred_fallthru
        _
    $region6: #{tpu_custom_call.1} parent=1 // loop_footer
      %s18 = sadd.s32 1, %s14
    $region7: #{tpu_custom_call.1} parent=1 // loop_footer_branch
      %13 = sbr.rel target = $region3
    $region8: #{tpu_custom_call.1} parent=1 // loop_exit
      _
    %1331 = vsyncpa [#allocation3], 1
    %s1332 = scalar_lea.sflag [#allocation3], 1
    %1333 = vsyncpa %s1332, 1

</llo_original>
